<compile_context>
chip_gen: v5e
topology: v5e:2x2
jax: 0.10.0
libtpu: 0.0.40
codegen_flags: <defaults>
</compile_context>

<pallas_src>
import functools
import math

import jax
import jax.numpy as jnp
from jax import lax
from jax.experimental import pallas as pl
from jax.experimental.pallas import tpu as pltpu

F32 = jnp.float32


def _round_up(x, m):
    return (x + m - 1) // m * m


# ----------------------------------------------------------------------------
# Fused (conv3x3 + BN + ReLU) x 2 kernel -- one batch TILE per grid step
# ----------------------------------------------------------------------------
def _double_conv_kernel(x_ref, w1_ref, b1_ref, w2_ref, b2_ref, o_ref,
                        mid_ref, lhs1_ref, lhs2_ref):
    """Per-grid-step shapes (Bt = batch tile, lane dims padded to 128):
      x_ref   : (Bt, H+2, K0p)     zero-padded input rows, (W,C) flattened
      w1_ref  : (3*K0p, N1p)       banded conv1 weights, BN1 scale folded in;
                                   output columns carry conv2's width padding
      b1_ref  : (1, N1p)  f32      folded BN1 bias (zero on pad columns)
      w2_ref  : (3*N1p, N2p)       banded conv2 weights, BN2 scale folded in
      b2_ref  : (1, N2p)  f32      folded BN2 bias
      o_ref   : (Bt, H, N2p)       lane-dense output rows
      mid_ref : (Bt, H+2, N1p)     VMEM scratch: padded intermediate map
      lhs1_ref: (Bt*H, 3*K0p)      VMEM scratch: stacked conv1 LHS
      lhs2_ref: (Bt*H, 3*N1p)      VMEM scratch: stacked conv2 LHS
    """
    Bt, Hp2, K0p = x_ref.shape
    H = Hp2 - 2
    N1p = mid_ref.shape[2]

    # The interior rows of `mid` are fully overwritten every step; only the
    # two height-padding rows per image must be zero (2*Bt single-row stores,
    # vs. the old full-scratch zero pass).  Done unconditionally so it stays
    # correct even if the batch grid is sharded across TensorCores.
    zrow = jnp.zeros((1, N1p), mid_ref.dtype)
    for b in range(Bt):
        mid_ref[b, pl.ds(0, 1), :] = zrow
        mid_ref[b, pl.ds(Hp2 - 1, 1), :] = zrow

    # ---- conv1 + BN1 + ReLU ----
    # Stack the 3 row-shifted windows of every image side by side (one VMEM
    # copy) -> a single MXU matmul with M = Bt*H, K = 3*K0p, f32 accumulation.
    for b in range(Bt):
        for dh in range(3):
            lhs1_ref[pl.ds(b * H, H), pl.ds(dh * K0p, K0p)] = \
                x_ref[b, pl.ds(dh, H), :]
    acc1 = jnp.dot(lhs1_ref[...], w1_ref[...],
                   preferred_element_type=jnp.float32)
    y1 = jnp.maximum(acc1 + b1_ref[...], 0.0).astype(mid_ref.dtype)

    # Intermediate stays in VMEM (no HBM round-trip).  Width padding is baked
    # into y1's zero-weight / zero-bias columns, so the stored interior rows
    # are already valid padded conv2 input rows.
    for b in range(Bt):
        mid_ref[b, pl.ds(1, H), :] = y1[b * H:(b + 1) * H, :]

    # ---- conv2 + BN2 + ReLU : same stacked-LHS single matmul ----
    for b in range(Bt):
        for dh in range(3):
            lhs2_ref[pl.ds(b * H, H), pl.ds(dh * N1p, N1p)] = \
                mid_ref[b, pl.ds(dh, H), :]
    acc2 = jnp.dot(lhs2_ref[...], w2_ref[...],
                   preferred_element_type=jnp.float32)
    y2 = jnp.maximum(acc2 + b2_ref[...], 0.0).astype(o_ref.dtype)
    for b in range(Bt):
        o_ref[b] = y2[b * H:(b + 1) * H, :]


# ----------------------------------------------------------------------------
# One-time parameter prep (OUTSIDE the jitted forward)
# ----------------------------------------------------------------------------
def _band_weights(wt, W, pad_out):
    """Fold the 3 width-taps of a 3x3 conv into one banded matrix per kernel
    row.  wt: [3, 3, Cin, Cout] (HWIO).  Returns [3, (W+2)*Cin, Wout*Cout]
    with Wout = W+2 if pad_out (output columns include the zero width-padding
    that the following conv consumes) else W."""
    bands = []
    for dh in range(3):
        acc = None
        for dw in range(3):
            if pad_out:
                # output block w' = w+1 selects input block i = w + dw = w'-1+dw
                sel = jnp.eye(W + 2, W + 2, k=1 - dw, dtype=wt.dtype)
                sel = sel.at[:, 0].set(0.0)
                sel = sel.at[:, W + 1].set(0.0)
            else:
                # output block w selects input block i = w + dw
                sel = jnp.eye(W + 2, W, k=-dw, dtype=wt.dtype)
            blk = jnp.kron(sel, wt[dh, dw])
            acc = blk if acc is None else acc + blk
        bands.append(acc)
    return jnp.stack(bands, axis=0)


def _fold_bn(conv_bias, gamma, beta, mean, var, eps):
    scale = gamma * lax.rsqrt(var + eps)
    bias = (conv_bias - mean) * scale + beta
    return scale, bias


def prepare_params(params, *, H, W, compute_dtype=jnp.bfloat16, eps=1e-5):
    """Runs ONCE: folds eval-mode BatchNorm into the conv weights/biases,
    builds banded weight matrices, pads all lane axes to multiples of 128."""
    w1, w2 = params["w1"], params["w2"]               # [3,3,Cin,Cout] (HWIO)
    C0, C1 = w1.shape[2], w1.shape[3]
    C2 = w2.shape[3]

    s1, b1 = _fold_bn(params["cb1"], params["bn1_g"], params["bn1_b"],
                      params["bn1_m"], params["bn1_v"], eps)
    s2, b2 = _fold_bn(params["cb2"], params["bn2_g"], params["bn2_b"],
                      params["bn2_m"], params["bn2_v"], eps)

    # Fold the BN scale into the output-channel columns of each conv weight.
    wb1 = _band_weights(w1 * s1[None, None, None, :], W, pad_out=True)
    wb2 = _band_weights(w2 * s2[None, None, None, :], W, pad_out=False)

    K0, N1, N2 = (W + 2) * C0, (W + 2) * C1, W * C2
    K0p = _round_up(K0, 128)
    N1p = _round_up(N1, 128)
    N2p = _round_up(N2, 128)

    wb1 = jnp.pad(wb1, ((0, 0), (0, K0p - K0), (0, N1p - N1)))
    wb2 = jnp.pad(wb2, ((0, 0), (0, N1p - N1), (0, N2p - N2)))

    zc1 = jnp.zeros((C1,), F32)
    b1f = jnp.concatenate([zc1, jnp.tile(b1, W), zc1,
                           jnp.zeros((N1p - N1,), F32)]).reshape(1, N1p)
    b2f = jnp.concatenate([jnp.tile(b2, W),
                           jnp.zeros((N2p - N2,), F32)]).reshape(1, N2p)

    return dict(wb1=wb1.reshape(3 * K0p, N1p).astype(compute_dtype),
                wb2=wb2.reshape(3 * N1p, N2p).astype(compute_dtype),
                b1=b1f, b2=b2f)


# ----------------------------------------------------------------------------
# Jitted forward: input layout + pallas_call + output layout
# ----------------------------------------------------------------------------
def _pick_batch_tile(B, H, max_rows=512):
    bt = 1
    for d in range(1, B + 1):
        if B % d == 0 and d * H <= max_rows:
            bt = d
    return bt


def double_convolution(x_nchw, prepped, *, c_out, compute_dtype=jnp.bfloat16):
    """DoubleConvolution forward (eval mode). x_nchw: [B, Cin, H, W]."""
    B, C0, H, W = x_nchw.shape
    wb1, wb2 = prepped["wb1"], prepped["wb2"]
    b1f, b2f = prepped["b1"], prepped["b2"]
    K0p, N1p = wb1.shape[0] // 3, wb1.shape[1]
    N2p = wb2.shape[1]
    N2 = W * c_out

    # Biggest batch tile whose M = Bt*H stays reasonable (one grid step here).
    Bt = _pick_batch_tile(B, H)

    # NCHW -> zero-padded rows flattened over (W, C), lane-padded to K0p.
    xh = jnp.transpose(x_nchw, (0, 2, 3, 1))                 # [B, H, W, C0]
    xp = jnp.pad(xh, ((0, 0), (1, 1), (1, 1), (0, 0)))       # [B, H+2, W+2, C0]
    xf = xp.reshape(B, H + 2, (W + 2) * C0)
    xf = jnp.pad(xf, ((0, 0), (0, 0), (0, K0p - (W + 2) * C0)))
    xf = xf.astype(compute_dtype)

    out_flat = pl.pallas_call(
        _double_conv_kernel,
        out_shape=jax.ShapeDtypeStruct((B, H, N2p), compute_dtype),
        grid=(B // Bt,),
        in_specs=[
            pl.BlockSpec((Bt, H + 2, K0p), lambda n: (n, 0, 0)),
            pl.BlockSpec((3 * K0p, N1p), lambda n: (0, 0)),
            pl.BlockSpec((1, N1p), lambda n: (0, 0)),
            pl.BlockSpec((3 * N1p, N2p), lambda n: (0, 0)),
            pl.BlockSpec((1, N2p), lambda n: (0, 0)),
        ],
        out_specs=pl.BlockSpec((Bt, H, N2p), lambda n: (n, 0, 0)),
        scratch_shapes=[
            pltpu.VMEM((Bt, H + 2, N1p), compute_dtype),   # padded intermediate
            pltpu.VMEM((Bt * H, 3 * K0p), compute_dtype),  # stacked conv1 LHS
            pltpu.VMEM((Bt * H, 3 * N1p), compute_dtype),  # stacked conv2 LHS
        ],
        compiler_params=pltpu.CompilerParams(
            dimension_semantics=("parallel",)),
    )(xf, wb1, b1f, wb2, b2f)

    # [B, H, N2p] -> [B, C2, H, W] (PyTorch NCHW); drop lane padding.
    out = out_flat[..., :N2].reshape(B, H, W, c_out)
    return jnp.transpose(out, (0, 3, 1, 2))


# ----------------------------------------------------------------------------
# Pure-JAX f32 reference (eval-mode semantics) for a sanity check
# ----------------------------------------------------------------------------
def reference_double_conv(x_nchw, params, eps=1e-5):
    def conv_bn_relu(x, w, cb, g, beta, m, v):
        y = lax.conv_general_dilated(
            x, w, window_strides=(1, 1), padding=((1, 1), (1, 1)),
            dimension_numbers=("NCHW", "HWIO", "NCHW"))
        y = y + cb[None, :, None, None]
        s = g / jnp.sqrt(v + eps)
        y = (y - m[None, :, None, None]) * s[None, :, None, None] \
            + beta[None, :, None, None]
        return jnp.maximum(y, 0.0)

    y = conv_bn_relu(x_nchw, params["w1"], params["cb1"], params["bn1_g"],
                     params["bn1_b"], params["bn1_m"], params["bn1_v"])
    return conv_bn_relu(y, params["w2"], params["cb2"], params["bn2_g"],
                        params["bn2_b"], params["bn2_m"], params["bn2_v"])


# ----------------------------------------------------------------------------
# Deterministic synthetic parameters (PyTorch-style init; non-trivial BN stats)
# ----------------------------------------------------------------------------
def init_params(key, c_in, c_out):
    ks = jax.random.split(key, 4)

    def conv_init(k, cin, cout):
        kw, kb = jax.random.split(k)
        bound = 1.0 / math.sqrt(cin * 9)
        w = jax.random.uniform(kw, (3, 3, cin, cout), F32, -bound, bound)
        b = jax.random.uniform(kb, (cout,), F32, -bound, bound)
        return w, b

    def bn_init(k, c):
        kg, kb, km, kv = jax.random.split(k, 4)
        return (jax.random.uniform(kg, (c,), F32, 0.5, 1.5),
                0.1 * jax.random.normal(kb, (c,), F32),
                0.1 * jax.random.normal(km, (c,), F32),
                jax.random.uniform(kv, (c,), F32, 0.5, 1.5))

    w1, cb1 = conv_init(ks[0], c_in, c_out)
    g1, be1, m1, v1 = bn_init(ks[1], c_out)
    w2, cb2 = conv_init(ks[2], c_out, c_out)
    g2, be2, m2, v2 = bn_init(ks[3], c_out)
    return dict(w1=w1, cb1=cb1, bn1_g=g1, bn1_b=be1, bn1_m=m1, bn1_v=v1,
                w2=w2, cb2=cb2, bn2_g=g2, bn2_b=be2, bn2_m=m2, bn2_v=v2)


# ----------------------------------------------------------------------------
if __name__ == "__main__":
    B, C_IN, C_OUT, H, W = 2, 4, 16, 16, 16   # NCHW input [2, 4, 16, 16]

    key = jax.random.PRNGKey(0)
    kp, kx = jax.random.split(key)
    params = init_params(kp, C_IN, C_OUT)
    x = jax.random.normal(kx, (B, C_IN, H, W), F32)

    prepped = prepare_params(params, H=H, W=W)      # one-time weight prep
    fwd = jax.jit(functools.partial(double_convolution, c_out=C_OUT))
    y = fwd(x, prepped)
    jax.block_until_ready(y)
    assert y.shape == (B, C_OUT, H, W)

    # Light correctness check vs. f32 reference (kernel uses bf16 operands,
    # bf16 intermediate and bf16 output with f32 MXU accumulation).
    y_ref = reference_double_conv(x, params)
    err = float(jnp.max(jnp.abs(y.astype(F32) - y_ref)))
    assert err < 1e-1, f"max abs error too large: {err}"

    print("KERNEL_OK")
</pallas_src>

<mosaic_0001>
module attributes {stable_mosaic.version = 11 : i64} {
  func.func @_double_conv_kernel(%arg0: i32, %arg1: memref<2x18x128xbf16, #tpu.memory_space<vmem>>, %arg2: memref<384x384xbf16, #tpu.memory_space<vmem>>, %arg3: memref<1x384xf32, #tpu.memory_space<vmem>>, %arg4: memref<1152x256xbf16, #tpu.memory_space<vmem>>, %arg5: memref<1x256xf32, #tpu.memory_space<vmem>>, %arg6: memref<2x16x256xbf16, #tpu.memory_space<vmem>>, %arg7: memref<2x18x384xbf16, #tpu.memory_space<vmem>>, %arg8: memref<32x384xbf16, #tpu.memory_space<vmem>>, %arg9: memref<32x1152xbf16, #tpu.memory_space<vmem>>) attributes {dimension_semantics = [#tpu.dimension_semantics<parallel>], iteration_bounds = array<i64: 1>, scalar_prefetch = 0 : i64, scratch_operands = 3 : i64, tpu.core_type = #tpu.core_type<tc>, window_params = [{transform_indices = @transform_0, window_bounds = array<i64: 2, 18, 128>}, {pipeline_mode = #tpu.pipeline_mode<synchronous>, transform_indices = @transform_1, window_bounds = array<i64: 384, 384>}, {pipeline_mode = #tpu.pipeline_mode<synchronous>, transform_indices = @transform_2, window_bounds = array<i64: 1, 384>}, {pipeline_mode = #tpu.pipeline_mode<synchronous>, transform_indices = @transform_3, window_bounds = array<i64: 1152, 256>}, {pipeline_mode = #tpu.pipeline_mode<synchronous>, transform_indices = @transform_4, window_bounds = array<i64: 1, 256>}, {transform_indices = @transform_5, window_bounds = array<i64: 2, 16, 256>}]} {
    %cst = arith.constant 0.000000e+00 : bf16
    %0 = vector.broadcast %cst : bf16 to vector<1x384xbf16>
    %c0 = arith.constant 0 : index
    %c0_0 = arith.constant 0 : index
    %c0_1 = arith.constant 0 : index
    %1 = vector.load %arg7[%c0, %c0_0, %c0_1] : memref<2x18x384xbf16, #tpu.memory_space<vmem>>, vector<1x1x384xbf16>
    %2 = vector.shape_cast %1 : vector<1x1x384xbf16> to vector<1x384xbf16>
    %3 = vector.shape_cast %0 : vector<1x384xbf16> to vector<1x1x384xbf16>
    tpu.vector_store %arg7[%c0, %c0_0, %c0_1], %3 {strides = array<i32>} : memref<2x18x384xbf16, #tpu.memory_space<vmem>>, vector<1x1x384xbf16>,
    %c0_2 = arith.constant 0 : index
    %c17 = arith.constant 17 : index
    %c0_3 = arith.constant 0 : index
    %4 = vector.load %arg7[%c0_2, %c17, %c0_3] : memref<2x18x384xbf16, #tpu.memory_space<vmem>>, vector<1x1x384xbf16>
    %5 = vector.shape_cast %4 : vector<1x1x384xbf16> to vector<1x384xbf16>
    %6 = vector.shape_cast %0 : vector<1x384xbf16> to vector<1x1x384xbf16>
    tpu.vector_store %arg7[%c0_2, %c17, %c0_3], %6 {strides = array<i32>} : memref<2x18x384xbf16, #tpu.memory_space<vmem>>, vector<1x1x384xbf16>,
    %c1 = arith.constant 1 : index
    %c0_4 = arith.constant 0 : index
    %c0_5 = arith.constant 0 : index
    %7 = vector.load %arg7[%c1, %c0_4, %c0_5] : memref<2x18x384xbf16, #tpu.memory_space<vmem>>, vector<1x1x384xbf16>
    %8 = vector.shape_cast %7 : vector<1x1x384xbf16> to vector<1x384xbf16>
    %9 = vector.shape_cast %0 : vector<1x384xbf16> to vector<1x1x384xbf16>
    tpu.vector_store %arg7[%c1, %c0_4, %c0_5], %9 {strides = array<i32>} : memref<2x18x384xbf16, #tpu.memory_space<vmem>>, vector<1x1x384xbf16>,
    %c1_6 = arith.constant 1 : index
    %c17_7 = arith.constant 17 : index
    %c0_8 = arith.constant 0 : index
    %10 = vector.load %arg7[%c1_6, %c17_7, %c0_8] : memref<2x18x384xbf16, #tpu.memory_space<vmem>>, vector<1x1x384xbf16>
    %11 = vector.shape_cast %10 : vector<1x1x384xbf16> to vector<1x384xbf16>
    %12 = vector.shape_cast %0 : vector<1x384xbf16> to vector<1x1x384xbf16>
    tpu.vector_store %arg7[%c1_6, %c17_7, %c0_8], %12 {strides = array<i32>} : memref<2x18x384xbf16, #tpu.memory_space<vmem>>, vector<1x1x384xbf16>,
    %c0_9 = arith.constant 0 : index
    %c0_10 = arith.constant 0 : index
    %c0_11 = arith.constant 0 : index
    %13 = vector.load %arg1[%c0_9, %c0_10, %c0_11] : memref<2x18x128xbf16, #tpu.memory_space<vmem>>, vector<1x16x128xbf16>
    %14 = vector.shape_cast %13 : vector<1x16x128xbf16> to vector<16x128xbf16>
    %c0_12 = arith.constant 0 : index
    %c0_13 = arith.constant 0 : index
    %15 = vector.load %arg8[%c0_12, %c0_13] : memref<32x384xbf16, #tpu.memory_space<vmem>>, vector<16x128xbf16>
    tpu.vector_store %arg8[%c0_12, %c0_13], %14 {strides = array<i32>} : memref<32x384xbf16, #tpu.memory_space<vmem>>, vector<16x128xbf16>,
    %c0_14 = arith.constant 0 : index
    %c1_15 = arith.constant 1 : index
    %c0_16 = arith.constant 0 : index
    %16 = vector.load %arg1[%c0_14, %c1_15, %c0_16] : memref<2x18x128xbf16, #tpu.memory_space<vmem>>, vector<1x16x128xbf16>
    %17 = vector.shape_cast %16 : vector<1x16x128xbf16> to vector<16x128xbf16>
    %c0_17 = arith.constant 0 : index
    %c128 = arith.constant 128 : index
    %18 = vector.load %arg8[%c0_17, %c128] : memref<32x384xbf16, #tpu.memory_space<vmem>>, vector<16x128xbf16>
    tpu.vector_store %arg8[%c0_17, %c128], %17 {strides = array<i32>} : memref<32x384xbf16, #tpu.memory_space<vmem>>, vector<16x128xbf16>,
    %c0_18 = arith.constant 0 : index
    %c2 = arith.constant 2 : index
    %c0_19 = arith.constant 0 : index
    %19 = vector.load %arg1[%c0_18, %c2, %c0_19] : memref<2x18x128xbf16, #tpu.memory_space<vmem>>, vector<1x16x128xbf16>
    %20 = vector.shape_cast %19 : vector<1x16x128xbf16> to vector<16x128xbf16>
    %c0_20 = arith.constant 0 : index
    %c256 = arith.constant 256 : index
    %21 = vector.load %arg8[%c0_20, %c256] : memref<32x384xbf16, #tpu.memory_space<vmem>>, vector<16x128xbf16>
    tpu.vector_store %arg8[%c0_20, %c256], %20 {strides = array<i32>} : memref<32x384xbf16, #tpu.memory_space<vmem>>, vector<16x128xbf16>,
    %c1_21 = arith.constant 1 : index
    %c0_22 = arith.constant 0 : index
    %c0_23 = arith.constant 0 : index
    %22 = vector.load %arg1[%c1_21, %c0_22, %c0_23] : memref<2x18x128xbf16, #tpu.memory_space<vmem>>, vector<1x16x128xbf16>
    %23 = vector.shape_cast %22 : vector<1x16x128xbf16> to vector<16x128xbf16>
    %c16 = arith.constant 16 : index
    %c0_24 = arith.constant 0 : index
    %24 = vector.load %arg8[%c16, %c0_24] : memref<32x384xbf16, #tpu.memory_space<vmem>>, vector<16x128xbf16>
    tpu.vector_store %arg8[%c16, %c0_24], %23 {strides = array<i32>} : memref<32x384xbf16, #tpu.memory_space<vmem>>, vector<16x128xbf16>,
    %c1_25 = arith.constant 1 : index
    %c1_26 = arith.constant 1 : index
    %c0_27 = arith.constant 0 : index
    %25 = vector.load %arg1[%c1_25, %c1_26, %c0_27] : memref<2x18x128xbf16, #tpu.memory_space<vmem>>, vector<1x16x128xbf16>
    %26 = vector.shape_cast %25 : vector<1x16x128xbf16> to vector<16x128xbf16>
    %c16_28 = arith.constant 16 : index
    %c128_29 = arith.constant 128 : index
    %27 = vector.load %arg8[%c16_28, %c128_29] : memref<32x384xbf16, #tpu.memory_space<vmem>>, vector<16x128xbf16>
    tpu.vector_store %arg8[%c16_28, %c128_29], %26 {strides = array<i32>} : memref<32x384xbf16, #tpu.memory_space<vmem>>, vector<16x128xbf16>,
    %c1_30 = arith.constant 1 : index
    %c2_31 = arith.constant 2 : index
    %c0_32 = arith.constant 0 : index
    %28 = vector.load %arg1[%c1_30, %c2_31, %c0_32] : memref<2x18x128xbf16, #tpu.memory_space<vmem>>, vector<1x16x128xbf16>
    %29 = vector.shape_cast %28 : vector<1x16x128xbf16> to vector<16x128xbf16>
    %c16_33 = arith.constant 16 : index
    %c256_34 = arith.constant 256 : index
    %30 = vector.load %arg8[%c16_33, %c256_34] : memref<32x384xbf16, #tpu.memory_space<vmem>>, vector<16x128xbf16>
    tpu.vector_store %arg8[%c16_33, %c256_34], %29 {strides = array<i32>} : memref<32x384xbf16, #tpu.memory_space<vmem>>, vector<16x128xbf16>,
    %c0_35 = arith.constant 0 : index
    %c0_36 = arith.constant 0 : index
    %31 = vector.load %arg8[%c0_35, %c0_36] : memref<32x384xbf16, #tpu.memory_space<vmem>>, vector<32x384xbf16>
    %c0_37 = arith.constant 0 : index
    %c0_38 = arith.constant 0 : index
    %32 = vector.load %arg2[%c0_37, %c0_38] : memref<384x384xbf16, #tpu.memory_space<vmem>>, vector<384x384xbf16>
    %cst_39 = arith.constant dense<0.000000e+00> : vector<32x384xf32>
    %33 = tpu.matmul %31, %32, %cst_39 {dimension_numbers = #tpu.dot_dimension_numbers<[1], [0], [0], [1], [0, 0, 1, 1], [], []>} : vector<32x384xbf16>, vector<384x384xbf16>, vector<32x384xf32> -> vector<32x384xf32>
    %c0_40 = arith.constant 0 : index
    %c0_41 = arith.constant 0 : index
    %34 = vector.load %arg3[%c0_40, %c0_41] : memref<1x384xf32, #tpu.memory_space<vmem>>, vector<1x384xf32>
    %35 = vector.broadcast %34 : vector<1x384xf32> to vector<32x384xf32>
    %36 = arith.addf %33, %35 : vector<32x384xf32>
    %cst_42 = arith.constant 0.000000e+00 : f32
    %37 = vector.broadcast %cst_42 : f32 to vector<32x384xf32>
    %38 = arith.maximumf %36, %37 : vector<32x384xf32>
    %39 = arith.truncf %38 : vector<32x384xf32> to vector<32x384xbf16>
    %40 = vector.extract_strided_slice %39 {offsets = [0, 0], sizes = [16, 384], strides = [1, 1]} : vector<32x384xbf16> to vector<16x384xbf16>
    %c0_43 = arith.constant 0 : index
    %c1_44 = arith.constant 1 : index
    %c0_45 = arith.constant 0 : index
    %41 = vector.load %arg7[%c0_43, %c1_44, %c0_45] : memref<2x18x384xbf16, #tpu.memory_space<vmem>>, vector<1x16x384xbf16>
    %42 = vector.shape_cast %41 : vector<1x16x384xbf16> to vector<16x384xbf16>
    %43 = vector.shape_cast %40 : vector<16x384xbf16> to vector<1x16x384xbf16>
    tpu.vector_store %arg7[%c0_43, %c1_44, %c0_45], %43 {strides = array<i32>} : memref<2x18x384xbf16, #tpu.memory_space<vmem>>, vector<1x16x384xbf16>,
    %44 = vector.extract_strided_slice %39 {offsets = [16, 0], sizes = [16, 384], strides = [1, 1]} : vector<32x384xbf16> to vector<16x384xbf16>
    %c1_46 = arith.constant 1 : index
    %c1_47 = arith.constant 1 : index
    %c0_48 = arith.constant 0 : index
    %45 = vector.load %arg7[%c1_46, %c1_47, %c0_48] : memref<2x18x384xbf16, #tpu.memory_space<vmem>>, vector<1x16x384xbf16>
    %46 = vector.shape_cast %45 : vector<1x16x384xbf16> to vector<16x384xbf16>
    %47 = vector.shape_cast %44 : vector<16x384xbf16> to vector<1x16x384xbf16>
    tpu.vector_store %arg7[%c1_46, %c1_47, %c0_48], %47 {strides = array<i32>} : memref<2x18x384xbf16, #tpu.memory_space<vmem>>, vector<1x16x384xbf16>,
    %c0_49 = arith.constant 0 : index
    %c0_50 = arith.constant 0 : index
    %c0_51 = arith.constant 0 : index
    %48 = vector.load %arg7[%c0_49, %c0_50, %c0_51] : memref<2x18x384xbf16, #tpu.memory_space<vmem>>, vector<1x16x384xbf16>
    %49 = vector.shape_cast %48 : vector<1x16x384xbf16> to vector<16x384xbf16>
    %c0_52 = arith.constant 0 : index
    %c0_53 = arith.constant 0 : index
    %50 = vector.load %arg9[%c0_52, %c0_53] : memref<32x1152xbf16, #tpu.memory_space<vmem>>, vector<16x384xbf16>
    tpu.vector_store %arg9[%c0_52, %c0_53], %49 {strides = array<i32>} : memref<32x1152xbf16, #tpu.memory_space<vmem>>, vector<16x384xbf16>,
    %c0_54 = arith.constant 0 : index
    %c1_55 = arith.constant 1 : index
    %c0_56 = arith.constant 0 : index
    %51 = vector.load %arg7[%c0_54, %c1_55, %c0_56] : memref<2x18x384xbf16, #tpu.memory_space<vmem>>, vector<1x16x384xbf16>
    %52 = vector.shape_cast %51 : vector<1x16x384xbf16> to vector<16x384xbf16>
    %c0_57 = arith.constant 0 : index
    %c384 = arith.constant 384 : index
    %53 = vector.load %arg9[%c0_57, %c384] : memref<32x1152xbf16, #tpu.memory_space<vmem>>, vector<16x384xbf16>
    tpu.vector_store %arg9[%c0_57, %c384], %52 {strides = array<i32>} : memref<32x1152xbf16, #tpu.memory_space<vmem>>, vector<16x384xbf16>,
    %c0_58 = arith.constant 0 : index
    %c2_59 = arith.constant 2 : index
    %c0_60 = arith.constant 0 : index
    %54 = vector.load %arg7[%c0_58, %c2_59, %c0_60] : memref<2x18x384xbf16, #tpu.memory_space<vmem>>, vector<1x16x384xbf16>
    %55 = vector.shape_cast %54 : vector<1x16x384xbf16> to vector<16x384xbf16>
    %c0_61 = arith.constant 0 : index
    %c768 = arith.constant 768 : index
    %56 = vector.load %arg9[%c0_61, %c768] : memref<32x1152xbf16, #tpu.memory_space<vmem>>, vector<16x384xbf16>
    tpu.vector_store %arg9[%c0_61, %c768], %55 {strides = array<i32>} : memref<32x1152xbf16, #tpu.memory_space<vmem>>, vector<16x384xbf16>,
    %c1_62 = arith.constant 1 : index
    %c0_63 = arith.constant 0 : index
    %c0_64 = arith.constant 0 : index
    %57 = vector.load %arg7[%c1_62, %c0_63, %c0_64] : memref<2x18x384xbf16, #tpu.memory_space<vmem>>, vector<1x16x384xbf16>
    %58 = vector.shape_cast %57 : vector<1x16x384xbf16> to vector<16x384xbf16>
    %c16_65 = arith.constant 16 : index
    %c0_66 = arith.constant 0 : index
    %59 = vector.load %arg9[%c16_65, %c0_66] : memref<32x1152xbf16, #tpu.memory_space<vmem>>, vector<16x384xbf16>
    tpu.vector_store %arg9[%c16_65, %c0_66], %58 {strides = array<i32>} : memref<32x1152xbf16, #tpu.memory_space<vmem>>, vector<16x384xbf16>,
    %c1_67 = arith.constant 1 : index
    %c1_68 = arith.constant 1 : index
    %c0_69 = arith.constant 0 : index
    %60 = vector.load %arg7[%c1_67, %c1_68, %c0_69] : memref<2x18x384xbf16, #tpu.memory_space<vmem>>, vector<1x16x384xbf16>
    %61 = vector.shape_cast %60 : vector<1x16x384xbf16> to vector<16x384xbf16>
    %c16_70 = arith.constant 16 : index
    %c384_71 = arith.constant 384 : index
    %62 = vector.load %arg9[%c16_70, %c384_71] : memref<32x1152xbf16, #tpu.memory_space<vmem>>, vector<16x384xbf16>
    tpu.vector_store %arg9[%c16_70, %c384_71], %61 {strides = array<i32>} : memref<32x1152xbf16, #tpu.memory_space<vmem>>, vector<16x384xbf16>,
    %c1_72 = arith.constant 1 : index
    %c2_73 = arith.constant 2 : index
    %c0_74 = arith.constant 0 : index
    %63 = vector.load %arg7[%c1_72, %c2_73, %c0_74] : memref<2x18x384xbf16, #tpu.memory_space<vmem>>, vector<1x16x384xbf16>
    %64 = vector.shape_cast %63 : vector<1x16x384xbf16> to vector<16x384xbf16>
    %c16_75 = arith.constant 16 : index
    %c768_76 = arith.constant 768 : index
    %65 = vector.load %arg9[%c16_75, %c768_76] : memref<32x1152xbf16, #tpu.memory_space<vmem>>, vector<16x384xbf16>
    tpu.vector_store %arg9[%c16_75, %c768_76], %64 {strides = array<i32>} : memref<32x1152xbf16, #tpu.memory_space<vmem>>, vector<16x384xbf16>,
    %c0_77 = arith.constant 0 : index
    %c0_78 = arith.constant 0 : index
    %66 = vector.load %arg9[%c0_77, %c0_78] : memref<32x1152xbf16, #tpu.memory_space<vmem>>, vector<32x1152xbf16>
    %c0_79 = arith.constant 0 : index
    %c0_80 = arith.constant 0 : index
    %67 = vector.load %arg4[%c0_79, %c0_80] : memref<1152x256xbf16, #tpu.memory_space<vmem>>, vector<1152x256xbf16>
    %cst_81 = arith.constant dense<0.000000e+00> : vector<32x256xf32>
    %68 = tpu.matmul %66, %67, %cst_81 {dimension_numbers = #tpu.dot_dimension_numbers<[1], [0], [0], [1], [0, 0, 1, 1], [], []>} : vector<32x1152xbf16>, vector<1152x256xbf16>, vector<32x256xf32> -> vector<32x256xf32>
    %c0_82 = arith.constant 0 : index
    %c0_83 = arith.constant 0 : index
    %69 = vector.load %arg5[%c0_82, %c0_83] : memref<1x256xf32, #tpu.memory_space<vmem>>, vector<1x256xf32>
    %70 = vector.broadcast %69 : vector<1x256xf32> to vector<32x256xf32>
    %71 = arith.addf %68, %70 : vector<32x256xf32>
    %cst_84 = arith.constant 0.000000e+00 : f32
    %72 = vector.broadcast %cst_84 : f32 to vector<32x256xf32>
    %73 = arith.maximumf %71, %72 : vector<32x256xf32>
    %74 = arith.truncf %73 : vector<32x256xf32> to vector<32x256xbf16>
    %75 = vector.extract_strided_slice %74 {offsets = [0, 0], sizes = [16, 256], strides = [1, 1]} : vector<32x256xbf16> to vector<16x256xbf16>
    %c0_85 = arith.constant 0 : index
    %c0_86 = arith.constant 0 : index
    %c0_87 = arith.constant 0 : index
    %76 = vector.load %arg6[%c0_85, %c0_86, %c0_87] : memref<2x16x256xbf16, #tpu.memory_space<vmem>>, vector<1x16x256xbf16>
    %77 = vector.shape_cast %76 : vector<1x16x256xbf16> to vector<16x256xbf16>
    %78 = vector.shape_cast %75 : vector<16x256xbf16> to vector<1x16x256xbf16>
    tpu.vector_store %arg6[%c0_85, %c0_86, %c0_87], %78 {strides = array<i32>} : memref<2x16x256xbf16, #tpu.memory_space<vmem>>, vector<1x16x256xbf16>,
    %79 = vector.extract_strided_slice %74 {offsets = [16, 0], sizes = [16, 256], strides = [1, 1]} : vector<32x256xbf16> to vector<16x256xbf16>
    %c1_88 = arith.constant 1 : index
    %c0_89 = arith.constant 0 : index
    %c0_90 = arith.constant 0 : index
    %80 = vector.load %arg6[%c1_88, %c0_89, %c0_90] : memref<2x16x256xbf16, #tpu.memory_space<vmem>>, vector<1x16x256xbf16>
    %81 = vector.shape_cast %80 : vector<1x16x256xbf16> to vector<16x256xbf16>
    %82 = vector.shape_cast %79 : vector<16x256xbf16> to vector<1x16x256xbf16>
    tpu.vector_store %arg6[%c1_88, %c0_89, %c0_90], %82 {strides = array<i32>} : memref<2x16x256xbf16, #tpu.memory_space<vmem>>, vector<1x16x256xbf16>,
    return
  }
  func.func @transform_0(%arg0: i32) -> (i32, i32, i32) {
    %c0_i32 = arith.constant 0 : i32
    %c0_i32_0 = arith.constant 0 : i32
    %c0_i32_1 = arith.constant 0 : i32
    return %arg0, %c0_i32, %c0_i32_0 : i32, i32, i32
  }
  func.func @transform_1(%arg0: i32) -> (i32, i32) {
    %c0_i32 = arith.constant 0 : i32
    %c0_i32_0 = arith.constant 0 : i32
    %c0_i32_1 = arith.constant 0 : i32
    return %c0_i32, %c0_i32_0 : i32, i32
  }
  func.func @transform_2(%arg0: i32) -> (i32, i32) {
    %c0_i32 = arith.constant 0 : i32
    %c0_i32_0 = arith.constant 0 : i32
    %c0_i32_1 = arith.constant 0 : i32
    return %c0_i32, %c0_i32_0 : i32, i32
  }
  func.func @transform_3(%arg0: i32) -> (i32, i32) {
    %c0_i32 = arith.constant 0 : i32
    %c0_i32_0 = arith.constant 0 : i32
    %c0_i32_1 = arith.constant 0 : i32
    return %c0_i32, %c0_i32_0 : i32, i32
  }
  func.func @transform_4(%arg0: i32) -> (i32, i32) {
    %c0_i32 = arith.constant 0 : i32
    %c0_i32_0 = arith.constant 0 : i32
    %c0_i32_1 = arith.constant 0 : i32
    return %c0_i32, %c0_i32_0 : i32, i32
  }
  func.func @transform_5(%arg0: i32) -> (i32, i32, i32) {
    %c0_i32 = arith.constant 0 : i32
    %c0_i32_0 = arith.constant 0 : i32
    %c0_i32_1 = arith.constant 0 : i32
    return %arg0, %c0_i32, %c0_i32_0 : i32, i32, i32
  }
}

</mosaic_0001>

<llo_original>
// kernel: double_convolution.1
$region0: #{double_convolution.1}
  #allocation0 [shape = 'u32[]', space=smem, size = 0x4, offset = 0x4, fixed_abs, tag = 'smem constant byte address 0x4 - core index']
  #allocation1 [shape = 'u32[72,128]{1,0:T(1,128)}', space=vmem, size = 0x9000, scoped, tag = 'internal scratch']
  #allocation2 [shape = 'bf16[2,18,384]{2,1,0:T(8,128)(2,1)}', space=vmem, size = 0x9000, scoped, tag = 'scratch operand']
  #allocation3 [shape = 'bf16[32,384]{1,0:T(8,128)(2,1)}', space=vmem, size = 0x6000, scoped, tag = 'scratch operand']
  #allocation4 [shape = 'bf16[32,1152]{1,0:T(8,128)(2,1)}', space=vmem, size = 0x12000, scoped, tag = 'scratch operand']
  %s0 = inlined_call_operand.vmem [shape: bf16[2,18,128], index: 0, kind: input, shape index: {}]
  %s1 = inlined_call_operand.vmem [shape: bf16[384,384], index: 1, kind: input, shape index: {}]
  %s2 = inlined_call_operand.vmem [shape: f32[1,384], index: 2, kind: input, shape index: {}]
  %s3 = inlined_call_operand.hbm [shape: bf16[1152,256], index: 3, kind: input, shape index: {}]
  %s4 = inlined_call_operand.vmem [shape: f32[1,256], index: 4, kind: input, shape index: {}]
  %s5 = inlined_call_operand.vmem [shape: bf16[2,16,256], index: 5, kind: output, shape index: {}]
  %s6 = sld [smem:[#allocation0]]
  $region34: #{double_convolution.1} parent=0
    _
  %s8 = ssub.s32 1, %s6
  %s9 = scalar_select 0, %s8, %s6
  $region1: #{double_convolution.1} parent=0
    #allocation5 [shape = 'u8[589824]{0}', space=vmem, size = 0x90000, scoped, tag = 'input window, operand 3, single buffered']
    #allocation6 [shape = 's32[1]{0}', space=sflag, size = 0x4, scoped, tag = 'scoped memory for double_convolution.1']
    %10 = vsyncpa [#allocation6], 0
    // Predicated region
    $region2: #{double_convolution.1} parent=1 // pred_check
      _
    $region3: #{double_convolution.1} parent=1 // pred_check_branch
      %12 = sbr.rel (0) target = $region5
    $region4: #{double_convolution.1} parent=1 // pred_region
      _
    $region5: #{double_convolution.1} parent=1 // pred_fallthru
      _
    // Predicated region
    $region6: #{double_convolution.1} parent=1 // pred_check
      _
    $region7: #{double_convolution.1} parent=1 // pred_check_branch
      %14 = sbr.rel (0) target = $region9
    $region8: #{double_convolution.1} parent=1 // pred_region
      _
    $region9: #{double_convolution.1} parent=1 // pred_fallthru
      _
    // Predicated region
    $region10: #{double_convolution.1} parent=1 // pred_check
      _
    $region11: #{double_convolution.1} parent=1 // pred_check_branch
      %16 = sbr.rel (0) target = $region13
    $region12: #{double_convolution.1} parent=1 // pred_region
      _
    $region13: #{double_convolution.1} parent=1 // pred_fallthru
      _
    // Predicated region
    $region14: #{double_convolution.1} parent=1 // pred_check
      _
    $region15: #{double_convolution.1} parent=1 // pred_check_branch
      %18 = sbr.rel (0) target = $region17
    $region16: #{double_convolution.1} parent=1 // pred_region
      %20 = vsyncadd [#allocation6], 0
      %s21 = sshll.u32 %s3, 4
      %s22 = int_to_ptr.hbm [resolvable:$true] %s21
      %s23 = sshll.u32 [#allocation5], 4
      %s24 = int_to_ptr.vmem [resolvable:$true] %s23
      %29 = dma.hbm_to_vmem [thread:$0]  %s22, 18432, %s24, [#allocation6], 128, 128, 8
    $region17: #{double_convolution.1} parent=1 // pred_fallthru
      _
    // Predicated region
    $region18: #{double_convolution.1} parent=1 // pred_check
      _
    $region19: #{double_convolution.1} parent=1 // pred_check_branch
      %31 = sbr.rel (0) target = $region21
    $region20: #{double_convolution.1} parent=1 // pred_region
      _
    $region21: #{double_convolution.1} parent=1 // pred_fallthru
      _
    // Predicated region
    $region22: #{double_convolution.1} parent=1 // pred_check
      _
    $region23: #{double_convolution.1} parent=1 // pred_check_branch
      %33 = sbr.rel (0) target = $region25
    $region24: #{double_convolution.1} parent=1 // pred_region
      %35 = dma.done [#allocation6], 18432
    $region25: #{double_convolution.1} parent=1 // pred_fallthru
      _
    %vm37 = vcmask 1040384
    %vm38 = vsmask.f32 256
    %vm39 = vmand %vm37, %vm38
    %vm40 = vcmask 1044484
    %vm41 = vsmask.f32 4352
    %vm42 = vmand %vm40, %vm41
    %vm43 = vmor %vm42, %vm39
    %v44 = vld [vmem:[#allocation2] sm:$0x11]
    %v45 = vsel %vm43, 0, %v44
    %46 = vst [vmem:[#allocation2] sm:$0x11] %v45
    %v47 = vld [vmem:[#allocation2 + $0x8] sm:$0x1]
    %v48 = vsel %vm39, 0, %v47
    %49 = vst [vmem:[#allocation2 + $0x8] sm:$0x1] %v48
    %vm50 = vsmask.f32 7938
    %vm51 = vmand %vm37, %vm50
    %vm52 = vsmask.f32 7954
    %vm53 = vmand %vm40, %vm52
    %vm54 = vmor %vm53, %vm51
    %v55 = vld [vmem:[#allocation2 + $0x18] sm:$0x11]
    %v56 = vsel %vm54, 0, %v55
    %57 = vst [vmem:[#allocation2 + $0x18] sm:$0x11] %v56
    %v58 = vld [vmem:[#allocation2 + $0x20] sm:$0x1]
    %v59 = vsel %vm51, 0, %v58
    %60 = vst [vmem:[#allocation2 + $0x20] sm:$0x1] %v59
    %s61 = scalar_lea.vmem [#allocation2], 36
    %v62 = vld [vmem:[%s61] sm:$0x11]
    %v63 = vsel %vm43, 0, %v62
    %64 = vst [vmem:[%s61] sm:$0x11] %v63
    %v65 = vld [vmem:[%s61 + $0x8] sm:$0x1]
    %v66 = vsel %vm39, 0, %v65
    %67 = vst [vmem:[%s61 + $0x8] sm:$0x1] %v66
    %v68 = vld [vmem:[%s61 + $0x18] sm:$0x11]
    %v69 = vsel %vm54, 0, %v68
    %70 = vst [vmem:[%s61 + $0x18] sm:$0x11] %v69
    %v71 = vld [vmem:[%s61 + $0x20] sm:$0x1]
    %v72 = vsel %vm51, 0, %v71
    %73 = vst [vmem:[%s61 + $0x20] sm:$0x1] %v72
    %v74 = vld [vmem:[%s0] sm:$0xf]
    %v75 = vld [vmem:[%s0 + $0x4] sm:$0xf]
    %76 = vst [vmem:[#allocation3] sm:$0xf] %v74
    %77 = vst [vmem:[#allocation3 + $0xc] sm:$0xf] %v75
    %v78 = vld [vmem:[%s0] sm:$0xf]
    %v79 = vld [vmem:[%s0 + $0x4] sm:$0xf]
    %v80 = vld [vmem:[%s0 + $0x8] sm:$0x1]
    %vm81 = vsmask.f32 3328
    %vm82 = vsmask.f32 7440
    %vm83 = vmor %vm81, %vm82
    %v85 = vshrl.u32 %v78, 16
    %v87 = vrot.slane %v85, 4
    %v88 = vshll.u32 %v78, 16
    %v90 = vrot.slane %v88, 5
    %v91 = vor.u32 %v87, %v90
    %v92 = vrot.slane %v91, 4
    %v94 = vshll.u32 %v79, 16
    %v96 = vrot.slane %v94, 5
    %v97 = vsel %vm83, %v92, %v96
    %v98 = vshrl.u32 %v79, 16
    %v100 = vrot.slane %v98, 4
    %v101 = vor.u32 %v100, %v96
    %v102 = vrot.slane %v101, 4
    %v104 = vshll.u32 %v80, 16
    %v106 = vrot.slane %v104, 5
    %v107 = vsel %vm83, %v102, %v106
    %110 = vst [vmem:[#allocation3 + $0x4] sm:$0xf] %v97
    %111 = vst [vmem:[#allocation3 + $0x10] sm:$0xf] %v107
    %v112 = vld [vmem:[%s0] sm:$0xe]
    %v113 = vld [vmem:[%s0 + $0x4] sm:$0xf]
    %v114 = vld [vmem:[%s0 + $0x8] sm:$0x1]
    %vm118 = vcmask 1042432
    %vm119 = vcmask 1046532
    %vm120 = vmor %vm118, %vm119
    %v121 = vrot.slane %v112, 5
    %v122 = vrot.slane %v121, 4
    %v123 = vrot.slane %v113, 5
    %v124 = vsel %vm120, %v122, %v123
    %v125 = vrot.slane %v123, 4
    %v126 = vrot.slane %v114, 5
    %v127 = vsel %vm120, %v125, %v126
    %130 = vst [vmem:[#allocation3 + $0x8] sm:$0xf] %v124
    %131 = vst [vmem:[#allocation3 + $0x14] sm:$0xf] %v127
    %s132 = scalar_lea.vmem %s0, 12
    %v133 = vld [vmem:[%s132] sm:$0xf]
    %v134 = vld [vmem:[%s132 + $0x4] sm:$0xf]
    %135 = vst [vmem:[#allocation3 + $0x18] sm:$0xf] %v133
    %136 = vst [vmem:[#allocation3 + $0x24] sm:$0xf] %v134
    %v137 = vld [vmem:[%s132] sm:$0xf]
    %v138 = vld [vmem:[%s132 + $0x4] sm:$0xf]
    %v139 = vld [vmem:[%s132 + $0x8] sm:$0x1]
    %v141 = vshrl.u32 %v137, 16
    %v143 = vrot.slane %v141, 4
    %v144 = vshll.u32 %v137, 16
    %v146 = vrot.slane %v144, 5
    %v147 = vor.u32 %v143, %v146
    %v148 = vrot.slane %v147, 4
    %v150 = vshll.u32 %v138, 16
    %v152 = vrot.slane %v150, 5
    %v153 = vsel %vm83, %v148, %v152
    %v154 = vshrl.u32 %v138, 16
    %v156 = vrot.slane %v154, 4
    %v157 = vor.u32 %v156, %v152
    %v158 = vrot.slane %v157, 4
    %v160 = vshll.u32 %v139, 16
    %v162 = vrot.slane %v160, 5
    %v163 = vsel %vm83, %v158, %v162
    %166 = vst [vmem:[#allocation3 + $0x1c] sm:$0xf] %v153
    %167 = vst [vmem:[#allocation3 + $0x28] sm:$0xf] %v163
    %v168 = vld [vmem:[%s132] sm:$0xe]
    %v169 = vld [vmem:[%s132 + $0x4] sm:$0xf]
    %v170 = vld [vmem:[%s132 + $0x8] sm:$0x1]
    %v174 = vrot.slane %v168, 5
    %v175 = vrot.slane %v174, 4
    %v176 = vrot.slane %v169, 5
    %v177 = vsel %vm120, %v175, %v176
    %v178 = vrot.slane %v176, 4
    %v179 = vrot.slane %v170, 5
    %v180 = vsel %vm120, %v178, %v179
    %183 = vst [vmem:[#allocation3 + $0x20] sm:$0xf] %v177
    %184 = vst [vmem:[#allocation3 + $0x2c] sm:$0xf] %v180
    %v185 = vld [vmem:[#allocation3] sm:$0xff]
    %v186 = vld [vmem:[#allocation3 + $0x8] sm:$0xf]
    %v187 = vld [vmem:[#allocation3 + $0xc] sm:$0xff]
    %v188 = vld [vmem:[#allocation3 + $0x14] sm:$0xf]
    %v189 = vld [vmem:[#allocation3 + $0x18] sm:$0xff]
    %v190 = vld [vmem:[#allocation3 + $0x20] sm:$0xf]
    %v191 = vld [vmem:[#allocation3 + $0x24] sm:$0xff]
    %v192 = vld [vmem:[#allocation3 + $0x2c] sm:$0xf]
    %v193 = vld [vmem:[%s1] sm:$0xff]
    %v194 = vld [vmem:[%s1 + $0x8] sm:$0xf]
    %v195 = vld [vmem:[%s1 + $0xc] sm:$0xff]
    %v196 = vld [vmem:[%s1 + $0x14] sm:$0xf]
    %v197 = vld [vmem:[%s1 + $0x18] sm:$0xff]
    %v198 = vld [vmem:[%s1 + $0x20] sm:$0xf]
    %v199 = vld [vmem:[%s1 + $0x24] sm:$0xff]
    %v200 = vld [vmem:[%s1 + $0x2c] sm:$0xf]
    %v201 = vld [vmem:[%s1 + $0x30] sm:$0xff]
    %v202 = vld [vmem:[%s1 + $0x38] sm:$0xf]
    %v203 = vld [vmem:[%s1 + $0x3c] sm:$0xff]
    %v204 = vld [vmem:[%s1 + $0x44] sm:$0xf]
    %v205 = vld [vmem:[%s1 + $0x48] sm:$0xff]
    %v206 = vld [vmem:[%s1 + $0x50] sm:$0xf]
    %v207 = vld [vmem:[%s1 + $0x54] sm:$0xff]
    %v208 = vld [vmem:[%s1 + $0x5c] sm:$0xf]
    %v209 = vld [vmem:[%s1 + $0x60] sm:$0xff]
    %v210 = vld [vmem:[%s1 + $0x68] sm:$0xf]
    %v211 = vld [vmem:[%s1 + $0x6c] sm:$0xff]
    %v212 = vld [vmem:[%s1 + $0x74] sm:$0xf]
    %v213 = vld [vmem:[%s1 + $0x78] sm:$0xff]
    %v214 = vld [vmem:[%s1 + $0x80] sm:$0xf]
    %v215 = vld [vmem:[%s1 + $0x84] sm:$0xff]
    %v216 = vld [vmem:[%s1 + $0x8c] sm:$0xf]
    %v217 = vld [vmem:[%s1 + $0x90] sm:$0xff]
    %v218 = vld [vmem:[%s1 + $0x98] sm:$0xf]
    %v219 = vld [vmem:[%s1 + $0x9c] sm:$0xff]
    %v220 = vld [vmem:[%s1 + $0xa4] sm:$0xf]
    %v221 = vld [vmem:[%s1 + $0xa8] sm:$0xff]
    %v222 = vld [vmem:[%s1 + $0xb0] sm:$0xf]
    %v223 = vld [vmem:[%s1 + $0xb4] sm:$0xff]
    %v224 = vld [vmem:[%s1 + $0xbc] sm:$0xf]
    %v225 = vld [vmem:[%s1 + $0xc0] sm:$0xff]
    %v226 = vld [vmem:[%s1 + $0xc8] sm:$0xf]
    %v227 = vld [vmem:[%s1 + $0xcc] sm:$0xff]
    %v228 = vld [vmem:[%s1 + $0xd4] sm:$0xf]
    %v229 = vld [vmem:[%s1 + $0xd8] sm:$0xff]
    %v230 = vld [vmem:[%s1 + $0xe0] sm:$0xf]
    %v231 = vld [vmem:[%s1 + $0xe4] sm:$0xff]
    %v232 = vld [vmem:[%s1 + $0xec] sm:$0xf]
    %v233 = vld [vmem:[%s1 + $0xf0] sm:$0xff]
    %v234 = vld [vmem:[%s1 + $0xf8] sm:$0xf]
    %v235 = vld [vmem:[%s1 + $0xfc] sm:$0xff]
    %v236 = vld [vmem:[%s1 + $0x104] sm:$0xf]
    %v237 = vld [vmem:[%s1 + $0x108] sm:$0xff]
    %v238 = vld [vmem:[%s1 + $0x110] sm:$0xf]
    %v239 = vld [vmem:[%s1 + $0x114] sm:$0xff]
    %v240 = vld [vmem:[%s1 + $0x11c] sm:$0xf]
    %v241 = vld [vmem:[%s1 + $0x120] sm:$0xff]
    %v242 = vld [vmem:[%s1 + $0x128] sm:$0xf]
    %v243 = vld [vmem:[%s1 + $0x12c] sm:$0xff]
    %v244 = vld [vmem:[%s1 + $0x134] sm:$0xf]
    %v245 = vld [vmem:[%s1 + $0x138] sm:$0xff]
    %v246 = vld [vmem:[%s1 + $0x140] sm:$0xf]
    %v247 = vld [vmem:[%s1 + $0x144] sm:$0xff]
    %v248 = vld [vmem:[%s1 + $0x14c] sm:$0xf]
    %v249 = vld [vmem:[%s1 + $0x150] sm:$0xff]
    %v250 = vld [vmem:[%s1 + $0x158] sm:$0xf]
    %v251 = vld [vmem:[%s1 + $0x15c] sm:$0xff]
    %v252 = vld [vmem:[%s1 + $0x164] sm:$0xf]
    %v253 = vld [vmem:[%s1 + $0x168] sm:$0xff]
    %v254 = vld [vmem:[%s1 + $0x170] sm:$0xf]
    %v255 = vld [vmem:[%s1 + $0x174] sm:$0xff]
    %v256 = vld [vmem:[%s1 + $0x17c] sm:$0xf]
    %v257 = vld [vmem:[%s1 + $0x180] sm:$0xff]
    %v258 = vld [vmem:[%s1 + $0x188] sm:$0xf]
    %v259 = vld [vmem:[%s1 + $0x18c] sm:$0xff]
    %v260 = vld [vmem:[%s1 + $0x194] sm:$0xf]
    %v261 = vld [vmem:[%s1 + $0x198] sm:$0xff]
    %v262 = vld [vmem:[%s1 + $0x1a0] sm:$0xf]
    %v263 = vld [vmem:[%s1 + $0x1a4] sm:$0xff]
    %v264 = vld [vmem:[%s1 + $0x1ac] sm:$0xf]
    %v265 = vld [vmem:[%s1 + $0x1b0] sm:$0xff]
    %v266 = vld [vmem:[%s1 + $0x1b8] sm:$0xf]
    %v267 = vld [vmem:[%s1 + $0x1bc] sm:$0xff]
    %v268 = vld [vmem:[%s1 + $0x1c4] sm:$0xf]
    %v269 = vld [vmem:[%s1 + $0x1c8] sm:$0xff]
    %v270 = vld [vmem:[%s1 + $0x1d0] sm:$0xf]
    %v271 = vld [vmem:[%s1 + $0x1d4] sm:$0xff]
    %v272 = vld [vmem:[%s1 + $0x1dc] sm:$0xf]
    %v273 = vld [vmem:[%s1 + $0x1e0] sm:$0xff]
    %v274 = vld [vmem:[%s1 + $0x1e8] sm:$0xf]
    %v275 = vld [vmem:[%s1 + $0x1ec] sm:$0xff]
    %v276 = vld [vmem:[%s1 + $0x1f4] sm:$0xf]
    %v277 = vld [vmem:[%s1 + $0x1f8] sm:$0xff]
    %v278 = vld [vmem:[%s1 + $0x200] sm:$0xf]
    %v279 = vld [vmem:[%s1 + $0x204] sm:$0xff]
    %v280 = vld [vmem:[%s1 + $0x20c] sm:$0xf]
    %v281 = vld [vmem:[%s1 + $0x210] sm:$0xff]
    %v282 = vld [vmem:[%s1 + $0x218] sm:$0xf]
    %v283 = vld [vmem:[%s1 + $0x21c] sm:$0xff]
    %v284 = vld [vmem:[%s1 + $0x224] sm:$0xf]
    %v285 = vld [vmem:[%s1 + $0x228] sm:$0xff]
    %v286 = vld [vmem:[%s1 + $0x230] sm:$0xf]
    %v287 = vld [vmem:[%s1 + $0x234] sm:$0xff]
    %v288 = vld [vmem:[%s1 + $0x23c] sm:$0xf]
    %v289 = vld [vmem:[%s2] sm:$0x7]
    %v291 = vperm.slane %v289, 0
    %v292 = vperm.slane %v289, 1
    %v293 = vperm.slane %v289, 2
    %v305 = vunpack.c.l.b16 %v185
    %v306 = vunpack.c.h.b16 %v185
    %v307 = vunpack.c.l.b16 %v186
    %v308 = vunpack.c.l.b16 %v187
    %v309 = vunpack.c.h.b16 %v187
    %v310 = vunpack.c.l.b16 %v188
    %v311 = vunpack.c.l.b16 %v189
    %v312 = vunpack.c.h.b16 %v189
    %v313 = vunpack.c.l.b16 %v190
    %v314 = vunpack.c.l.b16 %v191
    %v315 = vunpack.c.h.b16 %v191
    %v316 = vunpack.c.l.b16 %v192
    %v317 = vpack.c.b16 %v308, %v305
    %v318 = vpack.c.b16 %v309, %v306
    %v319 = vpack.c.b16 %v310, %v307
    %v320 = vpack.c.b16 %v314, %v311
    %v321 = vpack.c.b16 %v315, %v312
    %v322 = vpack.c.b16 %v316, %v313
    %v425 = vunpack.c.l.b16 %v193
    %v426 = vunpack.c.h.b16 %v193
    %v427 = vunpack.c.l.b16 %v194
    %v428 = vunpack.c.l.b16 %v195
    %v429 = vunpack.c.h.b16 %v195
    %v430 = vunpack.c.l.b16 %v196
    %v431 = vunpack.c.l.b16 %v197
    %v432 = vunpack.c.h.b16 %v197
    %v433 = vunpack.c.l.b16 %v198
    %v434 = vunpack.c.l.b16 %v199
    %v435 = vunpack.c.h.b16 %v199
    %v436 = vunpack.c.l.b16 %v200
    %v437 = vunpack.c.l.b16 %v201
    %v438 = vunpack.c.h.b16 %v201
    %v439 = vunpack.c.l.b16 %v202
    %v440 = vunpack.c.l.b16 %v203
    %v441 = vunpack.c.h.b16 %v203
    %v442 = vunpack.c.l.b16 %v204
    %v443 = vunpack.c.l.b16 %v205
    %v444 = vunpack.c.h.b16 %v205
    %v445 = vunpack.c.l.b16 %v206
    %v446 = vunpack.c.l.b16 %v207
    %v447 = vunpack.c.h.b16 %v207
    %v448 = vunpack.c.l.b16 %v208
    %v449 = vunpack.c.l.b16 %v209
    %v450 = vunpack.c.h.b16 %v209
    %v451 = vunpack.c.l.b16 %v210
    %v452 = vunpack.c.l.b16 %v211
    %v453 = vunpack.c.h.b16 %v211
    %v454 = vunpack.c.l.b16 %v212
    %v455 = vunpack.c.l.b16 %v213
    %v456 = vunpack.c.h.b16 %v213
    %v457 = vunpack.c.l.b16 %v214
    %v458 = vunpack.c.l.b16 %v215
    %v459 = vunpack.c.h.b16 %v215
    %v460 = vunpack.c.l.b16 %v216
    %v461 = vunpack.c.l.b16 %v217
    %v462 = vunpack.c.h.b16 %v217
    %v463 = vunpack.c.l.b16 %v218
    %v464 = vunpack.c.l.b16 %v219
    %v465 = vunpack.c.h.b16 %v219
    %v466 = vunpack.c.l.b16 %v220
    %v467 = vunpack.c.l.b16 %v221
    %v468 = vunpack.c.h.b16 %v221
    %v469 = vunpack.c.l.b16 %v222
    %v470 = vunpack.c.l.b16 %v223
    %v471 = vunpack.c.h.b16 %v223
    %v472 = vunpack.c.l.b16 %v224
    %v473 = vunpack.c.l.b16 %v225
    %v474 = vunpack.c.h.b16 %v225
    %v475 = vunpack.c.l.b16 %v226
    %v476 = vunpack.c.l.b16 %v227
    %v477 = vunpack.c.h.b16 %v227
    %v478 = vunpack.c.l.b16 %v228
    %v479 = vunpack.c.l.b16 %v229
    %v480 = vunpack.c.h.b16 %v229
    %v481 = vunpack.c.l.b16 %v230
    %v482 = vunpack.c.l.b16 %v231
    %v483 = vunpack.c.h.b16 %v231
    %v484 = vunpack.c.l.b16 %v232
    %v485 = vunpack.c.l.b16 %v233
    %v486 = vunpack.c.h.b16 %v233
    %v487 = vunpack.c.l.b16 %v234
    %v488 = vunpack.c.l.b16 %v235
    %v489 = vunpack.c.h.b16 %v235
    %v490 = vunpack.c.l.b16 %v236
    %v491 = vunpack.c.l.b16 %v237
    %v492 = vunpack.c.h.b16 %v237
    %v493 = vunpack.c.l.b16 %v238
    %v494 = vunpack.c.l.b16 %v239
    %v495 = vunpack.c.h.b16 %v239
    %v496 = vunpack.c.l.b16 %v240
    %v497 = vunpack.c.l.b16 %v241
    %v498 = vunpack.c.h.b16 %v241
    %v499 = vunpack.c.l.b16 %v242
    %v500 = vunpack.c.l.b16 %v243
    %v501 = vunpack.c.h.b16 %v243
    %v502 = vunpack.c.l.b16 %v244
    %v503 = vunpack.c.l.b16 %v245
    %v504 = vunpack.c.h.b16 %v245
    %v505 = vunpack.c.l.b16 %v246
    %v506 = vunpack.c.l.b16 %v247
    %v507 = vunpack.c.h.b16 %v247
    %v508 = vunpack.c.l.b16 %v248
    %v509 = vunpack.c.l.b16 %v249
    %v510 = vunpack.c.h.b16 %v249
    %v511 = vunpack.c.l.b16 %v250
    %v512 = vunpack.c.l.b16 %v251
    %v513 = vunpack.c.h.b16 %v251
    %v514 = vunpack.c.l.b16 %v252
    %v515 = vunpack.c.l.b16 %v253
    %v516 = vunpack.c.h.b16 %v253
    %v517 = vunpack.c.l.b16 %v254
    %v518 = vunpack.c.l.b16 %v255
    %v519 = vunpack.c.h.b16 %v255
    %v520 = vunpack.c.l.b16 %v256
    %v521 = vunpack.c.l.b16 %v257
    %v522 = vunpack.c.h.b16 %v257
    %v523 = vunpack.c.l.b16 %v258
    %v524 = vunpack.c.l.b16 %v259
    %v525 = vunpack.c.h.b16 %v259
    %v526 = vunpack.c.l.b16 %v260
    %v527 = vunpack.c.l.b16 %v261
    %v528 = vunpack.c.h.b16 %v261
    %v529 = vunpack.c.l.b16 %v262
    %v530 = vunpack.c.l.b16 %v263
    %v531 = vunpack.c.h.b16 %v263
    %v532 = vunpack.c.l.b16 %v264
    %v533 = vunpack.c.l.b16 %v265
    %v534 = vunpack.c.h.b16 %v265
    %v535 = vunpack.c.l.b16 %v266
    %v536 = vunpack.c.l.b16 %v267
    %v537 = vunpack.c.h.b16 %v267
    %v538 = vunpack.c.l.b16 %v268
    %v539 = vunpack.c.l.b16 %v269
    %v540 = vunpack.c.h.b16 %v269
    %v541 = vunpack.c.l.b16 %v270
    %v542 = vunpack.c.l.b16 %v271
    %v543 = vunpack.c.h.b16 %v271
    %v544 = vunpack.c.l.b16 %v272
    %v545 = vunpack.c.l.b16 %v273
    %v546 = vunpack.c.h.b16 %v273
    %v547 = vunpack.c.l.b16 %v274
    %v548 = vunpack.c.l.b16 %v275
    %v549 = vunpack.c.h.b16 %v275
    %v550 = vunpack.c.l.b16 %v276
    %v551 = vunpack.c.l.b16 %v277
    %v552 = vunpack.c.h.b16 %v277
    %v553 = vunpack.c.l.b16 %v278
    %v554 = vunpack.c.l.b16 %v279
    %v555 = vunpack.c.h.b16 %v279
    %v556 = vunpack.c.l.b16 %v280
    %v557 = vunpack.c.l.b16 %v281
    %v558 = vunpack.c.h.b16 %v281
    %v559 = vunpack.c.l.b16 %v282
    %v560 = vunpack.c.l.b16 %v283
    %v561 = vunpack.c.h.b16 %v283
    %v562 = vunpack.c.l.b16 %v284
    %v563 = vunpack.c.l.b16 %v285
    %v564 = vunpack.c.h.b16 %v285
    %v565 = vunpack.c.l.b16 %v286
    %v566 = vunpack.c.l.b16 %v287
    %v567 = vunpack.c.h.b16 %v287
    %v568 = vunpack.c.l.b16 %v288
    %v569 = vpack.c.b16 %v428, %v425
    %v570 = vpack.c.b16 %v429, %v426
    %v571 = vpack.c.b16 %v430, %v427
    %v572 = vpack.c.b16 %v434, %v431
    %v573 = vpack.c.b16 %v435, %v432
    %v574 = vpack.c.b16 %v436, %v433
    %v575 = vpack.c.b16 %v440, %v437
    %v576 = vpack.c.b16 %v441, %v438
    %v577 = vpack.c.b16 %v442, %v439
    %v578 = vpack.c.b16 %v446, %v443
    %v579 = vpack.c.b16 %v447, %v444
    %v580 = vpack.c.b16 %v448, %v445
    %v581 = vpack.c.b16 %v452, %v449
    %v582 = vpack.c.b16 %v453, %v450
    %v583 = vpack.c.b16 %v454, %v451
    %v584 = vpack.c.b16 %v458, %v455
    %v585 = vpack.c.b16 %v459, %v456
    %v586 = vpack.c.b16 %v460, %v457
    %v587 = vpack.c.b16 %v464, %v461
    %v588 = vpack.c.b16 %v465, %v462
    %v589 = vpack.c.b16 %v466, %v463
    %v590 = vpack.c.b16 %v470, %v467
    %v591 = vpack.c.b16 %v471, %v468
    %v592 = vpack.c.b16 %v472, %v469
    %v593 = vpack.c.b16 %v476, %v473
    %v594 = vpack.c.b16 %v477, %v474
    %v595 = vpack.c.b16 %v478, %v475
    %v596 = vpack.c.b16 %v482, %v479
    %v597 = vpack.c.b16 %v483, %v480
    %v598 = vpack.c.b16 %v484, %v481
    %v599 = vpack.c.b16 %v488, %v485
    %v600 = vpack.c.b16 %v489, %v486
    %v601 = vpack.c.b16 %v490, %v487
    %v602 = vpack.c.b16 %v494, %v491
    %v603 = vpack.c.b16 %v495, %v492
    %v604 = vpack.c.b16 %v496, %v493
    %v605 = vpack.c.b16 %v500, %v497
    %v606 = vpack.c.b16 %v501, %v498
    %v607 = vpack.c.b16 %v502, %v499
    %v608 = vpack.c.b16 %v506, %v503
    %v609 = vpack.c.b16 %v507, %v504
    %v610 = vpack.c.b16 %v508, %v505
    %v611 = vpack.c.b16 %v512, %v509
    %v612 = vpack.c.b16 %v513, %v510
    %v613 = vpack.c.b16 %v514, %v511
    %v614 = vpack.c.b16 %v518, %v515
    %v615 = vpack.c.b16 %v519, %v516
    %v616 = vpack.c.b16 %v520, %v517
    %v617 = vpack.c.b16 %v524, %v521
    %v618 = vpack.c.b16 %v525, %v522
    %v619 = vpack.c.b16 %v526, %v523
    %v620 = vpack.c.b16 %v530, %v527
    %v621 = vpack.c.b16 %v531, %v528
    %v622 = vpack.c.b16 %v532, %v529
    %v623 = vpack.c.b16 %v536, %v533
    %v624 = vpack.c.b16 %v537, %v534
    %v625 = vpack.c.b16 %v538, %v535
    %v626 = vpack.c.b16 %v542, %v539
    %v627 = vpack.c.b16 %v543, %v540
    %v628 = vpack.c.b16 %v544, %v541
    %v629 = vpack.c.b16 %v548, %v545
    %v630 = vpack.c.b16 %v549, %v546
    %v631 = vpack.c.b16 %v550, %v547
    %v632 = vpack.c.b16 %v554, %v551
    %v633 = vpack.c.b16 %v555, %v552
    %v634 = vpack.c.b16 %v556, %v553
    %v635 = vpack.c.b16 %v560, %v557
    %v636 = vpack.c.b16 %v561, %v558
    %v637 = vpack.c.b16 %v562, %v559
    %v638 = vpack.c.b16 %v566, %v563
    %v639 = vpack.c.b16 %v567, %v564
    %v640 = vpack.c.b16 %v568, %v565
    %713 = vmatpush.bf16.msra.mxu0 %v590
    %714 = vmatpush.bf16.msra.mxu0 %v587
    %715 = vmatpush.bf16.msra.mxu0 %v584
    %716 = vmatpush.bf16.msra.mxu0 %v581
    %717 = vmatpush.bf16.msra.mxu0 %v578
    %718 = vmatpush.bf16.msra.mxu0 %v575
    %719 = vmatpush.bf16.msra.mxu0 %v572
    %720 = vmatpush.bf16.msra.mxu0 %v569
    %721 = vmatmul.bf16.gmra.mxu0 %v317
    %v722 = vpop.f32.mrf.mxu0
    %v723 = vadd.f32 %v291, %v722
    %v724 = vpop.f32.mrf.mxu0
    %v725 = vadd.f32 %v291, %v724
    %726 = vmatmul.bf16.gmra.mxu0 %v320
    %v727 = vpop.f32.mrf.mxu0
    %v728 = vadd.f32 %v291, %v727
    %v729 = vpop.f32.mrf.mxu0
    %v730 = vadd.f32 %v291, %v729
    %731 = vdwg.mxu0
    %732 = vmatpush.bf16.msra.mxu0 %v614
    %733 = vmatpush.bf16.msra.mxu0 %v611
    %734 = vmatpush.bf16.msra.mxu0 %v608
    %735 = vmatpush.bf16.msra.mxu0 %v605
    %736 = vmatpush.bf16.msra.mxu0 %v602
    %737 = vmatpush.bf16.msra.mxu0 %v599
    %738 = vmatpush.bf16.msra.mxu0 %v596
    %739 = vmatpush.bf16.msra.mxu0 %v593
    %740 = vmatmul.bf16.gmra.mxu0 %v318
    %v741 = vpop.f32.mrf.mxu0
    %v742 = vadd.f32 %v723, %v741
    %v743 = vpop.f32.mrf.mxu0
    %v744 = vadd.f32 %v725, %v743
    %745 = vmatmul.bf16.gmra.mxu0 %v321
    %v746 = vpop.f32.mrf.mxu0
    %v747 = vadd.f32 %v728, %v746
    %v748 = vpop.f32.mrf.mxu0
    %v749 = vadd.f32 %v730, %v748
    %750 = vdwg.mxu0
    %751 = vmatpush.bf16.msra.mxu0 %v638
    %752 = vmatpush.bf16.msra.mxu0 %v635
    %753 = vmatpush.bf16.msra.mxu0 %v632
    %754 = vmatpush.bf16.msra.mxu0 %v629
    %755 = vmatpush.bf16.msra.mxu0 %v626
    %756 = vmatpush.bf16.msra.mxu0 %v623
    %757 = vmatpush.bf16.msra.mxu0 %v620
    %758 = vmatpush.bf16.msra.mxu0 %v617
    %759 = vmatmul.bf16.gmra.mxu0 %v319
    %v760 = vpop.f32.mrf.mxu0
    %v761 = vadd.f32 %v742, %v760
    %v762 = vpop.f32.mrf.mxu0
    %v763 = vadd.f32 %v744, %v762
    %764 = vmatmul.bf16.gmra.mxu0 %v322
    %v765 = vpop.f32.mrf.mxu0
    %v766 = vadd.f32 %v747, %v765
    %v767 = vpop.f32.mrf.mxu0
    %v768 = vadd.f32 %v749, %v767
    %769 = vdwg.mxu0
    %770 = vmatpush.bf16.msra.mxu0 %v591
    %771 = vmatpush.bf16.msra.mxu0 %v588
    %772 = vmatpush.bf16.msra.mxu0 %v585
    %773 = vmatpush.bf16.msra.mxu0 %v582
    %774 = vmatpush.bf16.msra.mxu0 %v579
    %775 = vmatpush.bf16.msra.mxu0 %v576
    %776 = vmatpush.bf16.msra.mxu0 %v573
    %777 = vmatpush.bf16.msra.mxu0 %v570
    %778 = vmatmul.bf16.gmra.mxu0 %v317
    %v779 = vpop.f32.mrf.mxu0
    %v780 = vadd.f32 %v292, %v779
    %v781 = vpop.f32.mrf.mxu0
    %v782 = vadd.f32 %v292, %v781
    %783 = vmatmul.bf16.gmra.mxu0 %v320
    %v784 = vpop.f32.mrf.mxu0
    %v785 = vadd.f32 %v292, %v784
    %v786 = vpop.f32.mrf.mxu0
    %v787 = vadd.f32 %v292, %v786
    %788 = vdwg.mxu0
    %789 = vmatpush.bf16.msra.mxu0 %v615
    %790 = vmatpush.bf16.msra.mxu0 %v612
    %791 = vmatpush.bf16.msra.mxu0 %v609
    %792 = vmatpush.bf16.msra.mxu0 %v606
    %793 = vmatpush.bf16.msra.mxu0 %v603
    %794 = vmatpush.bf16.msra.mxu0 %v600
    %795 = vmatpush.bf16.msra.mxu0 %v597
    %796 = vmatpush.bf16.msra.mxu0 %v594
    %797 = vmatmul.bf16.gmra.mxu0 %v318
    %v798 = vpop.f32.mrf.mxu0
    %v799 = vadd.f32 %v780, %v798
    %v800 = vpop.f32.mrf.mxu0
    %v801 = vadd.f32 %v782, %v800
    %802 = vmatmul.bf16.gmra.mxu0 %v321
    %v803 = vpop.f32.mrf.mxu0
    %v804 = vadd.f32 %v785, %v803
    %v805 = vpop.f32.mrf.mxu0
    %v806 = vadd.f32 %v787, %v805
    %807 = vdwg.mxu0
    %808 = vmatpush.bf16.msra.mxu0 %v639
    %809 = vmatpush.bf16.msra.mxu0 %v636
    %810 = vmatpush.bf16.msra.mxu0 %v633
    %811 = vmatpush.bf16.msra.mxu0 %v630
    %812 = vmatpush.bf16.msra.mxu0 %v627
    %813 = vmatpush.bf16.msra.mxu0 %v624
    %814 = vmatpush.bf16.msra.mxu0 %v621
    %815 = vmatpush.bf16.msra.mxu0 %v618
    %816 = vmatmul.bf16.gmra.mxu0 %v319
    %v817 = vpop.f32.mrf.mxu0
    %v818 = vadd.f32 %v799, %v817
    %v819 = vpop.f32.mrf.mxu0
    %v820 = vadd.f32 %v801, %v819
    %821 = vmatmul.bf16.gmra.mxu0 %v322
    %v822 = vpop.f32.mrf.mxu0
    %v823 = vadd.f32 %v804, %v822
    %v824 = vpop.f32.mrf.mxu0
    %v825 = vadd.f32 %v806, %v824
    %826 = vdwg.mxu0
    %827 = vmatpush.bf16.msra.mxu0 %v592
    %828 = vmatpush.bf16.msra.mxu0 %v589
    %829 = vmatpush.bf16.msra.mxu0 %v586
    %830 = vmatpush.bf16.msra.mxu0 %v583
    %831 = vmatpush.bf16.msra.mxu0 %v580
    %832 = vmatpush.bf16.msra.mxu0 %v577
    %833 = vmatpush.bf16.msra.mxu0 %v574
    %834 = vmatpush.bf16.msra.mxu0 %v571
    %835 = vmatmul.bf16.gmra.mxu0 %v317
    %v836 = vpop.f32.mrf.mxu0
    %v837 = vadd.f32 %v293, %v836
    %v838 = vpop.f32.mrf.mxu0
    %v839 = vadd.f32 %v293, %v838
    %840 = vmatmul.bf16.gmra.mxu0 %v320
    %v841 = vpop.f32.mrf.mxu0
    %v842 = vadd.f32 %v293, %v841
    %v843 = vpop.f32.mrf.mxu0
    %v844 = vadd.f32 %v293, %v843
    %845 = vdwg.mxu0
    %846 = vmatpush.bf16.msra.mxu0 %v616
    %847 = vmatpush.bf16.msra.mxu0 %v613
    %848 = vmatpush.bf16.msra.mxu0 %v610
    %849 = vmatpush.bf16.msra.mxu0 %v607
    %850 = vmatpush.bf16.msra.mxu0 %v604
    %851 = vmatpush.bf16.msra.mxu0 %v601
    %852 = vmatpush.bf16.msra.mxu0 %v598
    %853 = vmatpush.bf16.msra.mxu0 %v595
    %854 = vmatmul.bf16.gmra.mxu0 %v318
    %v855 = vpop.f32.mrf.mxu0
    %v856 = vadd.f32 %v837, %v855
    %v857 = vpop.f32.mrf.mxu0
    %v858 = vadd.f32 %v839, %v857
    %859 = vmatmul.bf16.gmra.mxu0 %v321
    %v860 = vpop.f32.mrf.mxu0
    %v861 = vadd.f32 %v842, %v860
    %v862 = vpop.f32.mrf.mxu0
    %v863 = vadd.f32 %v844, %v862
    %864 = vdwg.mxu0
    %865 = vmatpush.bf16.msra.mxu0 %v640
    %866 = vmatpush.bf16.msra.mxu0 %v637
    %867 = vmatpush.bf16.msra.mxu0 %v634
    %868 = vmatpush.bf16.msra.mxu0 %v631
    %869 = vmatpush.bf16.msra.mxu0 %v628
    %870 = vmatpush.bf16.msra.mxu0 %v625
    %871 = vmatpush.bf16.msra.mxu0 %v622
    %872 = vmatpush.bf16.msra.mxu0 %v619
    %873 = vmatmul.bf16.gmra.mxu0 %v319
    %v874 = vpop.f32.mrf.mxu0
    %v875 = vadd.f32 %v856, %v874
    %v876 = vpop.f32.mrf.mxu0
    %v877 = vadd.f32 %v858, %v876
    %878 = vmatmul.bf16.gmra.mxu0 %v322
    %v879 = vpop.f32.mrf.mxu0
    %v880 = vadd.f32 %v861, %v879
    %v881 = vpop.f32.mrf.mxu0
    %v882 = vadd.f32 %v863, %v881
    %883 = vdwg.mxu0
    %v884 = vmax.f32 %v761, 0.0
    %v885 = vmax.f32 %v818, 0.0
    %v886 = vmax.f32 %v875, 0.0
    %v887 = vmax.f32 %v763, 0.0
    %v888 = vmax.f32 %v820, 0.0
    %v889 = vmax.f32 %v877, 0.0
    %v890 = vmax.f32 %v766, 0.0
    %v891 = vmax.f32 %v823, 0.0
    %v892 = vmax.f32 %v880, 0.0
    %v893 = vmax.f32 %v768, 0.0
    %v894 = vmax.f32 %v825, 0.0
    %v895 = vmax.f32 %v882, 0.0
    %v896 = vpack.c.bf16 %v885, %v884
    %v897 = vpack.c.bf16 %v886, %v886
    %v898 = vpack.c.bf16 %v888, %v887
    %v899 = vpack.c.bf16 %v889, %v889
    %v900 = vpack.c.bf16 %v891, %v890
    %v901 = vpack.c.bf16 %v892, %v892
    %v902 = vpack.c.bf16 %v894, %v893
    %v903 = vpack.c.bf16 %v895, %v895
    %vm904 = vsmask.f32 4368
    %vm905 = vmor %vm38, %vm904
    %v907 = vshrl.u32 %v896, 16
    %v909 = vrot.slane %v907, 7
    %v910 = vshll.u32 %v896, 16
    %v912 = vor.u32 %v909, %v910
    %v914 = vshrl.u32 %v897, 16
    %v916 = vrot.slane %v914, 7
    %v917 = vshll.u32 %v897, 16
    %v919 = vor.u32 %v916, %v917
    %v920 = vrot.slane %v909, 4
    %v922 = vshrl.u32 %v898, 16
    %v924 = vrot.slane %v922, 7
    %v925 = vshll.u32 %v898, 16
    %v927 = vor.u32 %v924, %v925
    %v928 = vsel %vm905, %v920, %v927
    %v929 = vrot.slane %v916, 4
    %v931 = vshrl.u32 %v899, 16
    %v933 = vrot.slane %v931, 7
    %v934 = vshll.u32 %v899, 16
    %v936 = vor.u32 %v933, %v934
    %v937 = vsel %vm905, %v929, %v936
    %v938 = vrot.slane %v924, 4
    %v939 = vrot.slane %v933, 4
    %vm946 = vcmask 1043456
    %vm947 = vmand %vm946, %vm50
    %vm948 = vcmask 1047556
    %vm949 = vmand %vm948, %vm52
    %vm950 = vmor %vm949, %vm947
    %v951 = vld [vmem:[#allocation2] sm:$0xff]
    %v952 = vsel %vm950, %v912, %v951
    %953 = vst [vmem:[#allocation2] sm:$0xff] %v952
    %v954 = vld [vmem:[#allocation2 + $0x8] sm:$0xf]
    %v955 = vsel %vm947, %v919, %v954
    %956 = vst [vmem:[#allocation2 + $0x8] sm:$0xf] %v955
    %957 = vst [vmem:[#allocation2 + $0xc] sm:$0xff] %v928
    %958 = vst [vmem:[#allocation2 + $0x14] sm:$0xf] %v937
    %v959 = vld [vmem:[#allocation2 + $0x18] sm:$0x11]
    %v960 = vsel %vm43, %v938, %v959
    %961 = vst [vmem:[#allocation2 + $0x18] sm:$0x11] %v960
    %v962 = vld [vmem:[#allocation2 + $0x20] sm:$0x1]
    %v963 = vsel %vm39, %v939, %v962
    %964 = vst [vmem:[#allocation2 + $0x20] sm:$0x1] %v963
    %v966 = vshrl.u32 %v900, 16
    %v968 = vrot.slane %v966, 7
    %v969 = vshll.u32 %v900, 16
    %v971 = vor.u32 %v968, %v969
    %v973 = vshrl.u32 %v901, 16
    %v975 = vrot.slane %v973, 7
    %v976 = vshll.u32 %v901, 16
    %v978 = vor.u32 %v975, %v976
    %v979 = vrot.slane %v968, 4
    %v981 = vshrl.u32 %v902, 16
    %v983 = vrot.slane %v981, 7
    %v984 = vshll.u32 %v902, 16
    %v986 = vor.u32 %v983, %v984
    %v987 = vsel %vm905, %v979, %v986
    %v988 = vrot.slane %v975, 4
    %v990 = vshrl.u32 %v903, 16
    %v992 = vrot.slane %v990, 7
    %v993 = vshll.u32 %v903, 16
    %v995 = vor.u32 %v992, %v993
    %v996 = vsel %vm905, %v988, %v995
    %v997 = vrot.slane %v983, 4
    %v998 = vrot.slane %v992, 4
    %v1005 = vld [vmem:[%s61] sm:$0xff]
    %v1006 = vsel %vm950, %v971, %v1005
    %1007 = vst [vmem:[%s61] sm:$0xff] %v1006
    %v1008 = vld [vmem:[%s61 + $0x8] sm:$0xf]
    %v1009 = vsel %vm947, %v978, %v1008
    %1010 = vst [vmem:[%s61 + $0x8] sm:$0xf] %v1009
    %1011 = vst [vmem:[%s61 + $0xc] sm:$0xff] %v987
    %1012 = vst [vmem:[%s61 + $0x14] sm:$0xf] %v996
    %v1013 = vld [vmem:[%s61 + $0x18] sm:$0x11]
    %v1014 = vsel %vm43, %v997, %v1013
    %1015 = vst [vmem:[%s61 + $0x18] sm:$0x11] %v1014
    %v1016 = vld [vmem:[%s61 + $0x20] sm:$0x1]
    %v1017 = vsel %vm39, %v998, %v1016
    %1018 = vst [vmem:[%s61 + $0x20] sm:$0x1] %v1017
    %v1019 = vld [vmem:[#allocation2] sm:$0xff]
    %v1020 = vld [vmem:[#allocation2 + $0x8] sm:$0xf]
    %v1021 = vld [vmem:[#allocation2 + $0xc] sm:$0xff]
    %v1022 = vld [vmem:[#allocation2 + $0x14] sm:$0xf]
    %1023 = vst [vmem:[#allocation4] sm:$0xff] %v1019
    %1024 = vst [vmem:[#allocation4 + $0x8] sm:$0xf] %v1020
    %1025 = vst [vmem:[#allocation4 + $0x24] sm:$0xff] %v1021
    %1026 = vst [vmem:[#allocation4 + $0x2c] sm:$0xf] %v1022
    %v1027 = vld [vmem:[#allocation2] sm:$0xff]
    %v1028 = vld [vmem:[#allocation2 + $0x8] sm:$0xf]
    %v1029 = vld [vmem:[#allocation2 + $0xc] sm:$0xff]
    %v1030 = vld [vmem:[#allocation2 + $0x14] sm:$0xf]
    %v1031 = vld [vmem:[#allocation2 + $0x18] sm:$0x11]
    %v1032 = vld [vmem:[#allocation2 + $0x20] sm:$0x1]
    %v1034 = vshrl.u32 %v1027, 16
    %v1036 = vrot.slane %v1034, 4
    %v1037 = vshll.u32 %v1027, 16
    %v1039 = vrot.slane %v1037, 5
    %v1040 = vor.u32 %v1036, %v1039
    %v1041 = vrot.slane %v1040, 4
    %v1043 = vshll.u32 %v1029, 16
    %v1045 = vrot.slane %v1043, 5
    %v1046 = vsel %vm83, %v1041, %v1045
    %v1048 = vshrl.u32 %v1028, 16
    %v1050 = vrot.slane %v1048, 4
    %v1051 = vshll.u32 %v1028, 16
    %v1053 = vrot.slane %v1051, 5
    %v1054 = vor.u32 %v1050, %v1053
    %v1055 = vrot.slane %v1054, 4
    %v1057 = vshll.u32 %v1030, 16
    %v1059 = vrot.slane %v1057, 5
    %v1060 = vsel %vm83, %v1055, %v1059
    %v1061 = vshrl.u32 %v1029, 16
    %v1063 = vrot.slane %v1061, 4
    %v1064 = vor.u32 %v1063, %v1045
    %v1065 = vrot.slane %v1064, 4
    %v1067 = vshll.u32 %v1031, 16
    %v1069 = vrot.slane %v1067, 5
    %v1070 = vsel %vm83, %v1065, %v1069
    %v1071 = vshrl.u32 %v1030, 16
    %v1073 = vrot.slane %v1071, 4
    %v1074 = vor.u32 %v1073, %v1059
    %v1075 = vrot.slane %v1074, 4
    %v1077 = vshll.u32 %v1032, 16
    %v1079 = vrot.slane %v1077, 5
    %v1080 = vsel %vm83, %v1075, %v1079
    %1085 = vst [vmem:[#allocation4 + $0xc] sm:$0xff] %v1046
    %1086 = vst [vmem:[#allocation4 + $0x14] sm:$0xf] %v1060
    %1087 = vst [vmem:[#allocation4 + $0x30] sm:$0xff] %v1070
    %1088 = vst [vmem:[#allocation4 + $0x38] sm:$0xf] %v1080
    %v1089 = vld [vmem:[#allocation2] sm:$0xee]
    %v1090 = vld [vmem:[#allocation2 + $0x8] sm:$0xe]
    %v1091 = vld [vmem:[#allocation2 + $0xc] sm:$0xff]
    %v1092 = vld [vmem:[#allocation2 + $0x14] sm:$0xf]
    %v1093 = vld [vmem:[#allocation2 + $0x18] sm:$0x11]
    %v1094 = vld [vmem:[#allocation2 + $0x20] sm:$0x1]
    %v1101 = vrot.slane %v1089, 5
    %v1102 = vrot.slane %v1101, 4
    %v1103 = vrot.slane %v1091, 5
    %v1104 = vsel %vm120, %v1102, %v1103
    %v1105 = vrot.slane %v1090, 5
    %v1106 = vrot.slane %v1105, 4
    %v1107 = vrot.slane %v1092, 5
    %v1108 = vsel %vm120, %v1106, %v1107
    %v1109 = vrot.slane %v1103, 4
    %v1110 = vrot.slane %v1093, 5
    %v1111 = vsel %vm120, %v1109, %v1110
    %v1112 = vrot.slane %v1107, 4
    %v1113 = vrot.slane %v1094, 5
    %v1114 = vsel %vm120, %v1112, %v1113
    %1119 = vst [vmem:[#allocation4 + $0x18] sm:$0xff] %v1104
    %1120 = vst [vmem:[#allocation4 + $0x20] sm:$0xf] %v1108
    %1121 = vst [vmem:[#allocation4 + $0x3c] sm:$0xff] %v1111
    %1122 = vst [vmem:[#allocation4 + $0x44] sm:$0xf] %v1114
    %v1123 = vld [vmem:[%s61] sm:$0xff]
    %v1124 = vld [vmem:[%s61 + $0x8] sm:$0xf]
    %v1125 = vld [vmem:[%s61 + $0xc] sm:$0xff]
    %v1126 = vld [vmem:[%s61 + $0x14] sm:$0xf]
    %1127 = vst [vmem:[#allocation4 + $0x48] sm:$0xff] %v1123
    %1128 = vst [vmem:[#allocation4 + $0x50] sm:$0xf] %v1124
    %1129 = vst [vmem:[#allocation4 + $0x6c] sm:$0xff] %v1125
    %1130 = vst [vmem:[#allocation4 + $0x74] sm:$0xf] %v1126
    %v1131 = vld [vmem:[%s61] sm:$0xff]
    %v1132 = vld [vmem:[%s61 + $0x8] sm:$0xf]
    %v1133 = vld [vmem:[%s61 + $0xc] sm:$0xff]
    %v1134 = vld [vmem:[%s61 + $0x14] sm:$0xf]
    %v1135 = vld [vmem:[%s61 + $0x18] sm:$0x11]
    %v1136 = vld [vmem:[%s61 + $0x20] sm:$0x1]
    %v1138 = vshrl.u32 %v1131, 16
    %v1140 = vrot.slane %v1138, 4
    %v1141 = vshll.u32 %v1131, 16
    %v1143 = vrot.slane %v1141, 5
    %v1144 = vor.u32 %v1140, %v1143
    %v1145 = vrot.slane %v1144, 4
    %v1147 = vshll.u32 %v1133, 16
    %v1149 = vrot.slane %v1147, 5
    %v1150 = vsel %vm83, %v1145, %v1149
    %v1152 = vshrl.u32 %v1132, 16
    %v1154 = vrot.slane %v1152, 4
    %v1155 = vshll.u32 %v1132, 16
    %v1157 = vrot.slane %v1155, 5
    %v1158 = vor.u32 %v1154, %v1157
    %v1159 = vrot.slane %v1158, 4
    %v1161 = vshll.u32 %v1134, 16
    %v1163 = vrot.slane %v1161, 5
    %v1164 = vsel %vm83, %v1159, %v1163
    %v1165 = vshrl.u32 %v1133, 16
    %v1167 = vrot.slane %v1165, 4
    %v1168 = vor.u32 %v1167, %v1149
    %v1169 = vrot.slane %v1168, 4
    %v1171 = vshll.u32 %v1135, 16
    %v1173 = vrot.slane %v1171, 5
    %v1174 = vsel %vm83, %v1169, %v1173
    %v1175 = vshrl.u32 %v1134, 16
    %v1177 = vrot.slane %v1175, 4
    %v1178 = vor.u32 %v1177, %v1163
    %v1179 = vrot.slane %v1178, 4
    %v1181 = vshll.u32 %v1136, 16
    %v1183 = vrot.slane %v1181, 5
    %v1184 = vsel %vm83, %v1179, %v1183
    %1189 = vst [vmem:[#allocation4 + $0x54] sm:$0xff] %v1150
    %1190 = vst [vmem:[#allocation4 + $0x5c] sm:$0xf] %v1164
    %1191 = vst [vmem:[#allocation4 + $0x78] sm:$0xff] %v1174
    %1192 = vst [vmem:[#allocation4 + $0x80] sm:$0xf] %v1184
    %v1193 = vld [vmem:[%s61] sm:$0xee]
    %v1194 = vld [vmem:[%s61 + $0x8] sm:$0xe]
    %v1195 = vld [vmem:[%s61 + $0xc] sm:$0xff]
    %v1196 = vld [vmem:[%s61 + $0x14] sm:$0xf]
    %v1197 = vld [vmem:[%s61 + $0x18] sm:$0x11]
    %v1198 = vld [vmem:[%s61 + $0x20] sm:$0x1]
    %v1205 = vrot.slane %v1193, 5
    %v1206 = vrot.slane %v1205, 4
    %v1207 = vrot.slane %v1195, 5
    %v1208 = vsel %vm120, %v1206, %v1207
    %v1209 = vrot.slane %v1194, 5
    %v1210 = vrot.slane %v1209, 4
    %v1211 = vrot.slane %v1196, 5
    %v1212 = vsel %vm120, %v1210, %v1211
    %v1213 = vrot.slane %v1207, 4
    %v1214 = vrot.slane %v1197, 5
    %v1215 = vsel %vm120, %v1213, %v1214
    %v1216 = vrot.slane %v1211, 4
    %v1217 = vrot.slane %v1198, 5
    %v1218 = vsel %vm120, %v1216, %v1217
    %1223 = vst [vmem:[#allocation4 + $0x60] sm:$0xff] %v1208
    %1224 = vst [vmem:[#allocation4 + $0x68] sm:$0xf] %v1212
    %1225 = vst [vmem:[#allocation4 + $0x84] sm:$0xff] %v1215
    %1226 = vst [vmem:[#allocation4 + $0x8c] sm:$0xf] %v1218
    %v1227 = vld [vmem:[#allocation4] sm:$0xff]
    %v1228 = vld [vmem:[#allocation4 + $0x8] sm:$0xff]
    %v1229 = vld [vmem:[#allocation4 + $0x10] sm:$0xff]
    %v1230 = vld [vmem:[#allocation4 + $0x18] sm:$0xff]
    %v1231 = vld [vmem:[#allocation4 + $0x20] sm:$0xf]
    %v1232 = vld [vmem:[#allocation4 + $0x24] sm:$0xff]
    %v1233 = vld [vmem:[#allocation4 + $0x2c] sm:$0xff]
    %v1234 = vld [vmem:[#allocation4 + $0x34] sm:$0xff]
    %v1235 = vld [vmem:[#allocation4 + $0x3c] sm:$0xff]
    %v1236 = vld [vmem:[#allocation4 + $0x44] sm:$0xf]
    %v1237 = vld [vmem:[#allocation4 + $0x48] sm:$0xff]
    %v1238 = vld [vmem:[#allocation4 + $0x50] sm:$0xff]
    %v1239 = vld [vmem:[#allocation4 + $0x58] sm:$0xff]
    %v1240 = vld [vmem:[#allocation4 + $0x60] sm:$0xff]
    %v1241 = vld [vmem:[#allocation4 + $0x68] sm:$0xf]
    %v1242 = vld [vmem:[#allocation4 + $0x6c] sm:$0xff]
    %v1243 = vld [vmem:[#allocation4 + $0x74] sm:$0xff]
    %v1244 = vld [vmem:[#allocation4 + $0x7c] sm:$0xff]
    %v1245 = vld [vmem:[#allocation4 + $0x84] sm:$0xff]
    %v1246 = vld [vmem:[#allocation4 + $0x8c] sm:$0xf]
    %v1247 = vld [vmem:[#allocation5] sm:$0xff]
    %v1248 = vld [vmem:[#allocation5 + $0x8] sm:$0xff]
    %v1249 = vld [vmem:[#allocation5 + $0x10] sm:$0xff]
    %v1250 = vld [vmem:[#allocation5 + $0x18] sm:$0xff]
    %v1251 = vld [vmem:[#allocation5 + $0x20] sm:$0xff]
    %v1252 = vld [vmem:[#allocation5 + $0x28] sm:$0xff]
    %v1253 = vld [vmem:[#allocation5 + $0x30] sm:$0xff]
    %v1254 = vld [vmem:[#allocation5 + $0x38] sm:$0xff]
    %v1255 = vld [vmem:[#allocation5 + $0x40] sm:$0xff]
    %v1256 = vld [vmem:[#allocation5 + $0x48] sm:$0xff]
    %v1257 = vld [vmem:[#allocation5 + $0x50] sm:$0xff]
    %v1258 = vld [vmem:[#allocation5 + $0x58] sm:$0xff]
    %v1259 = vld [vmem:[#allocation5 + $0x60] sm:$0xff]
    %v1260 = vld [vmem:[#allocation5 + $0x68] sm:$0xff]
    %v1261 = vld [vmem:[#allocation5 + $0x70] sm:$0xff]
    %v1262 = vld [vmem:[#allocation5 + $0x78] sm:$0xff]
    %v1263 = vld [vmem:[#allocation5 + $0x80] sm:$0xff]
    %v1264 = vld [vmem:[#allocation5 + $0x88] sm:$0xff]
    %v1265 = vld [vmem:[#allocation5 + $0x90] sm:$0xff]
    %v1266 = vld [vmem:[#allocation5 + $0x98] sm:$0xff]
    %v1267 = vld [vmem:[#allocation5 + $0xa0] sm:$0xff]
    %v1268 = vld [vmem:[#allocation5 + $0xa8] sm:$0xff]
    %v1269 = vld [vmem:[#allocation5 + $0xb0] sm:$0xff]
    %v1270 = vld [vmem:[#allocation5 + $0xb8] sm:$0xff]
    %v1271 = vld [vmem:[#allocation5 + $0xc0] sm:$0xff]
    %v1272 = vld [vmem:[#allocation5 + $0xc8] sm:$0xff]
    %v1273 = vld [vmem:[#allocation5 + $0xd0] sm:$0xff]
    %v1274 = vld [vmem:[#allocation5 + $0xd8] sm:$0xff]
    %v1275 = vld [vmem:[#allocation5 + $0xe0] sm:$0xff]
    %v1276 = vld [vmem:[#allocation5 + $0xe8] sm:$0xff]
    %v1277 = vld [vmem:[#allocation5 + $0xf0] sm:$0xff]
    %v1278 = vld [vmem:[#allocation5 + $0xf8] sm:$0xff]
    %v1279 = vld [vmem:[#allocation5 + $0x100] sm:$0xff]
    %v1280 = vld [vmem:[#allocation5 + $0x108] sm:$0xff]
    %v1281 = vld [vmem:[#allocation5 + $0x110] sm:$0xff]
    %v1282 = vld [vmem:[#allocation5 + $0x118] sm:$0xff]
    %v1283 = vld [vmem:[#allocation5 + $0x120] sm:$0xff]
    %v1284 = vld [vmem:[#allocation5 + $0x128] sm:$0xff]
    %v1285 = vld [vmem:[#allocation5 + $0x130] sm:$0xff]
    %v1286 = vld [vmem:[#allocation5 + $0x138] sm:$0xff]
    %v1287 = vld [vmem:[#allocation5 + $0x140] sm:$0xff]
    %v1288 = vld [vmem:[#allocation5 + $0x148] sm:$0xff]
    %v1289 = vld [vmem:[#allocation5 + $0x150] sm:$0xff]
    %v1290 = vld [vmem:[#allocation5 + $0x158] sm:$0xff]
    %v1291 = vld [vmem:[#allocation5 + $0x160] sm:$0xff]
    %v1292 = vld [vmem:[#allocation5 + $0x168] sm:$0xff]
    %v1293 = vld [vmem:[#allocation5 + $0x170] sm:$0xff]
    %v1294 = vld [vmem:[#allocation5 + $0x178] sm:$0xff]
    %v1295 = vld [vmem:[#allocation5 + $0x180] sm:$0xff]
    %v1296 = vld [vmem:[#allocation5 + $0x188] sm:$0xff]
    %v1297 = vld [vmem:[#allocation5 + $0x190] sm:$0xff]
    %v1298 = vld [vmem:[#allocation5 + $0x198] sm:$0xff]
    %v1299 = vld [vmem:[#allocation5 + $0x1a0] sm:$0xff]
    %v1300 = vld [vmem:[#allocation5 + $0x1a8] sm:$0xff]
    %v1301 = vld [vmem:[#allocation5 + $0x1b0] sm:$0xff]
    %v1302 = vld [vmem:[#allocation5 + $0x1b8] sm:$0xff]
    %v1303 = vld [vmem:[#allocation5 + $0x1c0] sm:$0xff]
    %v1304 = vld [vmem:[#allocation5 + $0x1c8] sm:$0xff]
    %v1305 = vld [vmem:[#allocation5 + $0x1d0] sm:$0xff]
    %v1306 = vld [vmem:[#allocation5 + $0x1d8] sm:$0xff]
    %v1307 = vld [vmem:[#allocation5 + $0x1e0] sm:$0xff]
    %v1308 = vld [vmem:[#allocation5 + $0x1e8] sm:$0xff]
    %v1309 = vld [vmem:[#allocation5 + $0x1f0] sm:$0xff]
    %v1310 = vld [vmem:[#allocation5 + $0x1f8] sm:$0xff]
    %v1311 = vld [vmem:[#allocation5 + $0x200] sm:$0xff]
    %v1312 = vld [vmem:[#allocation5 + $0x208] sm:$0xff]
    %v1313 = vld [vmem:[#allocation5 + $0x210] sm:$0xff]
    %v1314 = vld [vmem:[#allocation5 + $0x218] sm:$0xff]
    %v1315 = vld [vmem:[#allocation5 + $0x220] sm:$0xff]
    %v1316 = vld [vmem:[#allocation5 + $0x228] sm:$0xff]
    %v1317 = vld [vmem:[#allocation5 + $0x230] sm:$0xff]
    %v1318 = vld [vmem:[#allocation5 + $0x238] sm:$0xff]
    %v1319 = vld [vmem:[#allocation5 + $0x240] sm:$0xff]
    %v1320 = vld [vmem:[#allocation5 + $0x248] sm:$0xff]
    %v1321 = vld [vmem:[#allocation5 + $0x250] sm:$0xff]
    %v1322 = vld [vmem:[#allocation5 + $0x258] sm:$0xff]
    %v1323 = vld [vmem:[#allocation5 + $0x260] sm:$0xff]
    %v1324 = vld [vmem:[#allocation5 + $0x268] sm:$0xff]
    %v1325 = vld [vmem:[#allocation5 + $0x270] sm:$0xff]
    %v1326 = vld [vmem:[#allocation5 + $0x278] sm:$0xff]
    %v1327 = vld [vmem:[#allocation5 + $0x280] sm:$0xff]
    %v1328 = vld [vmem:[#allocation5 + $0x288] sm:$0xff]
    %v1329 = vld [vmem:[#allocation5 + $0x290] sm:$0xff]
    %v1330 = vld [vmem:[#allocation5 + $0x298] sm:$0xff]
    %v1331 = vld [vmem:[#allocation5 + $0x2a0] sm:$0xff]
    %v1332 = vld [vmem:[#allocation5 + $0x2a8] sm:$0xff]
    %v1333 = vld [vmem:[#allocation5 + $0x2b0] sm:$0xff]
    %v1334 = vld [vmem:[#allocation5 + $0x2b8] sm:$0xff]
    %v1335 = vld [vmem:[#allocation5 + $0x2c0] sm:$0xff]
    %v1336 = vld [vmem:[#allocation5 + $0x2c8] sm:$0xff]
    %v1337 = vld [vmem:[#allocation5 + $0x2d0] sm:$0xff]
    %v1338 = vld [vmem:[#allocation5 + $0x2d8] sm:$0xff]
    %v1339 = vld [vmem:[#allocation5 + $0x2e0] sm:$0xff]
    %v1340 = vld [vmem:[#allocation5 + $0x2e8] sm:$0xff]
    %v1341 = vld [vmem:[#allocation5 + $0x2f0] sm:$0xff]
    %v1342 = vld [vmem:[#allocation5 + $0x2f8] sm:$0xff]
    %v1343 = vld [vmem:[#allocation5 + $0x300] sm:$0xff]
    %v1344 = vld [vmem:[#allocation5 + $0x308] sm:$0xff]
    %v1345 = vld [vmem:[#allocation5 + $0x310] sm:$0xff]
    %v1346 = vld [vmem:[#allocation5 + $0x318] sm:$0xff]
    %v1347 = vld [vmem:[#allocation5 + $0x320] sm:$0xff]
    %v1348 = vld [vmem:[#allocation5 + $0x328] sm:$0xff]
    %v1349 = vld [vmem:[#allocation5 + $0x330] sm:$0xff]
    %v1350 = vld [vmem:[#allocation5 + $0x338] sm:$0xff]
    %v1351 = vld [vmem:[#allocation5 + $0x340] sm:$0xff]
    %v1352 = vld [vmem:[#allocation5 + $0x348] sm:$0xff]
    %v1353 = vld [vmem:[#allocation5 + $0x350] sm:$0xff]
    %v1354 = vld [vmem:[#allocation5 + $0x358] sm:$0xff]
    %v1355 = vld [vmem:[#allocation5 + $0x360] sm:$0xff]
    %v1356 = vld [vmem:[#allocation5 + $0x368] sm:$0xff]
    %v1357 = vld [vmem:[#allocation5 + $0x370] sm:$0xff]
    %v1358 = vld [vmem:[#allocation5 + $0x378] sm:$0xff]
    %v1359 = vld [vmem:[#allocation5 + $0x380] sm:$0xff]
    %v1360 = vld [vmem:[#allocation5 + $0x388] sm:$0xff]
    %v1361 = vld [vmem:[#allocation5 + $0x390] sm:$0xff]
    %v1362 = vld [vmem:[#allocation5 + $0x398] sm:$0xff]
    %v1363 = vld [vmem:[#allocation5 + $0x3a0] sm:$0xff]
    %v1364 = vld [vmem:[#allocation5 + $0x3a8] sm:$0xff]
    %v1365 = vld [vmem:[#allocation5 + $0x3b0] sm:$0xff]
    %v1366 = vld [vmem:[#allocation5 + $0x3b8] sm:$0xff]
    %v1367 = vld [vmem:[#allocation5 + $0x3c0] sm:$0xff]
    %v1368 = vld [vmem:[#allocation5 + $0x3c8] sm:$0xff]
    %v1369 = vld [vmem:[#allocation5 + $0x3d0] sm:$0xff]
    %v1370 = vld [vmem:[#allocation5 + $0x3d8] sm:$0xff]
    %v1371 = vld [vmem:[#allocation5 + $0x3e0] sm:$0xff]
    %v1372 = vld [vmem:[#allocation5 + $0x3e8] sm:$0xff]
    %v1373 = vld [vmem:[#allocation5 + $0x3f0] sm:$0xff]
    %v1374 = vld [vmem:[#allocation5 + $0x3f8] sm:$0xff]
    %v1375 = vld [vmem:[#allocation5 + $0x400] sm:$0xff]
    %v1376 = vld [vmem:[#allocation5 + $0x408] sm:$0xff]
    %v1377 = vld [vmem:[#allocation5 + $0x410] sm:$0xff]
    %v1378 = vld [vmem:[#allocation5 + $0x418] sm:$0xff]
    %v1379 = vld [vmem:[#allocation5 + $0x420] sm:$0xff]
    %v1380 = vld [vmem:[#allocation5 + $0x428] sm:$0xff]
    %v1381 = vld [vmem:[#allocation5 + $0x430] sm:$0xff]
    %v1382 = vld [vmem:[#allocation5 + $0x438] sm:$0xff]
    %v1383 = vld [vmem:[#allocation5 + $0x440] sm:$0xff]
    %v1384 = vld [vmem:[#allocation5 + $0x448] sm:$0xff]
    %v1385 = vld [vmem:[#allocation5 + $0x450] sm:$0xff]
    %v1386 = vld [vmem:[#allocation5 + $0x458] sm:$0xff]
    %v1387 = vld [vmem:[#allocation5 + $0x460] sm:$0xff]
    %v1388 = vld [vmem:[#allocation5 + $0x468] sm:$0xff]
    %v1389 = vld [vmem:[#allocation5 + $0x470] sm:$0xff]
    %v1390 = vld [vmem:[#allocation5 + $0x478] sm:$0xff]
    %v1391 = vld [vmem:[%s4] sm:$0x3]
    %v1393 = vperm.slane %v1391, 0
    %v1394 = vperm.slane %v1391, 1
    %v1417 = vunpack.c.l.b16 %v1227
    %v1418 = vunpack.c.h.b16 %v1227
    %v1419 = vunpack.c.l.b16 %v1228
    %v1420 = vunpack.c.h.b16 %v1228
    %v1421 = vunpack.c.l.b16 %v1229
    %v1422 = vunpack.c.h.b16 %v1229
    %v1423 = vunpack.c.l.b16 %v1230
    %v1424 = vunpack.c.h.b16 %v1230
    %v1425 = vunpack.c.l.b16 %v1231
    %v1426 = vunpack.c.l.b16 %v1232
    %v1427 = vunpack.c.h.b16 %v1232
    %v1428 = vunpack.c.l.b16 %v1233
    %v1429 = vunpack.c.h.b16 %v1233
    %v1430 = vunpack.c.l.b16 %v1234
    %v1431 = vunpack.c.h.b16 %v1234
    %v1432 = vunpack.c.l.b16 %v1235
    %v1433 = vunpack.c.h.b16 %v1235
    %v1434 = vunpack.c.l.b16 %v1236
    %v1435 = vunpack.c.l.b16 %v1237
    %v1436 = vunpack.c.h.b16 %v1237
    %v1437 = vunpack.c.l.b16 %v1238
    %v1438 = vunpack.c.h.b16 %v1238
    %v1439 = vunpack.c.l.b16 %v1239
    %v1440 = vunpack.c.h.b16 %v1239
    %v1441 = vunpack.c.l.b16 %v1240
    %v1442 = vunpack.c.h.b16 %v1240
    %v1443 = vunpack.c.l.b16 %v1241
    %v1444 = vunpack.c.l.b16 %v1242
    %v1445 = vunpack.c.h.b16 %v1242
    %v1446 = vunpack.c.l.b16 %v1243
    %v1447 = vunpack.c.h.b16 %v1243
    %v1448 = vunpack.c.l.b16 %v1244
    %v1449 = vunpack.c.h.b16 %v1244
    %v1450 = vunpack.c.l.b16 %v1245
    %v1451 = vunpack.c.h.b16 %v1245
    %v1452 = vunpack.c.l.b16 %v1246
    %v1453 = vpack.c.b16 %v1426, %v1417
    %v1454 = vpack.c.b16 %v1427, %v1418
    %v1455 = vpack.c.b16 %v1428, %v1419
    %v1456 = vpack.c.b16 %v1429, %v1420
    %v1457 = vpack.c.b16 %v1430, %v1421
    %v1458 = vpack.c.b16 %v1431, %v1422
    %v1459 = vpack.c.b16 %v1432, %v1423
    %v1460 = vpack.c.b16 %v1433, %v1424
    %v1461 = vpack.c.b16 %v1434, %v1425
    %v1462 = vpack.c.b16 %v1444, %v1435
    %v1463 = vpack.c.b16 %v1445, %v1436
    %v1464 = vpack.c.b16 %v1446, %v1437
    %v1465 = vpack.c.b16 %v1447, %v1438
    %v1466 = vpack.c.b16 %v1448, %v1439
    %v1467 = vpack.c.b16 %v1449, %v1440
    %v1468 = vpack.c.b16 %v1450, %v1441
    %v1469 = vpack.c.b16 %v1451, %v1442
    %v1470 = vpack.c.b16 %v1452, %v1443
    %v1633 = vunpack.c.l.b16 %v1247
    %v1634 = vunpack.c.h.b16 %v1247
    %v1635 = vunpack.c.l.b16 %v1248
    %v1636 = vunpack.c.h.b16 %v1248
    %v1637 = vunpack.c.l.b16 %v1249
    %v1638 = vunpack.c.h.b16 %v1249
    %v1639 = vunpack.c.l.b16 %v1250
    %v1640 = vunpack.c.h.b16 %v1250
    %v1641 = vunpack.c.l.b16 %v1251
    %v1642 = vunpack.c.h.b16 %v1251
    %v1643 = vunpack.c.l.b16 %v1252
    %v1644 = vunpack.c.h.b16 %v1252
    %v1645 = vunpack.c.l.b16 %v1253
    %v1646 = vunpack.c.h.b16 %v1253
    %v1647 = vunpack.c.l.b16 %v1254
    %v1648 = vunpack.c.h.b16 %v1254
    %v1649 = vunpack.c.l.b16 %v1255
    %v1650 = vunpack.c.h.b16 %v1255
    %v1651 = vunpack.c.l.b16 %v1256
    %v1652 = vunpack.c.h.b16 %v1256
    %v1653 = vunpack.c.l.b16 %v1257
    %v1654 = vunpack.c.h.b16 %v1257
    %v1655 = vunpack.c.l.b16 %v1258
    %v1656 = vunpack.c.h.b16 %v1258
    %v1657 = vunpack.c.l.b16 %v1259
    %v1658 = vunpack.c.h.b16 %v1259
    %v1659 = vunpack.c.l.b16 %v1260
    %v1660 = vunpack.c.h.b16 %v1260
    %v1661 = vunpack.c.l.b16 %v1261
    %v1662 = vunpack.c.h.b16 %v1261
    %v1663 = vunpack.c.l.b16 %v1262
    %v1664 = vunpack.c.h.b16 %v1262
    %v1665 = vunpack.c.l.b16 %v1263
    %v1666 = vunpack.c.h.b16 %v1263
    %v1667 = vunpack.c.l.b16 %v1264
    %v1668 = vunpack.c.h.b16 %v1264
    %v1669 = vunpack.c.l.b16 %v1265
    %v1670 = vunpack.c.h.b16 %v1265
    %v1671 = vunpack.c.l.b16 %v1266
    %v1672 = vunpack.c.h.b16 %v1266
    %v1673 = vunpack.c.l.b16 %v1267
    %v1674 = vunpack.c.h.b16 %v1267
    %v1675 = vunpack.c.l.b16 %v1268
    %v1676 = vunpack.c.h.b16 %v1268
    %v1677 = vunpack.c.l.b16 %v1269
    %v1678 = vunpack.c.h.b16 %v1269
    %v1679 = vunpack.c.l.b16 %v1270
    %v1680 = vunpack.c.h.b16 %v1270
    %v1681 = vunpack.c.l.b16 %v1271
    %v1682 = vunpack.c.h.b16 %v1271
    %v1683 = vunpack.c.l.b16 %v1272
    %v1684 = vunpack.c.h.b16 %v1272
    %v1685 = vunpack.c.l.b16 %v1273
    %v1686 = vunpack.c.h.b16 %v1273
    %v1687 = vunpack.c.l.b16 %v1274
    %v1688 = vunpack.c.h.b16 %v1274
    %v1689 = vunpack.c.l.b16 %v1275
    %v1690 = vunpack.c.h.b16 %v1275
    %v1691 = vunpack.c.l.b16 %v1276
    %v1692 = vunpack.c.h.b16 %v1276
    %v1693 = vunpack.c.l.b16 %v1277
    %v1694 = vunpack.c.h.b16 %v1277
    %v1695 = vunpack.c.l.b16 %v1278
    %v1696 = vunpack.c.h.b16 %v1278
    %v1697 = vunpack.c.l.b16 %v1279
    %v1698 = vunpack.c.h.b16 %v1279
    %v1699 = vunpack.c.l.b16 %v1280
    %v1700 = vunpack.c.h.b16 %v1280
    %v1701 = vunpack.c.l.b16 %v1281
    %v1702 = vunpack.c.h.b16 %v1281
    %v1703 = vunpack.c.l.b16 %v1282
    %v1704 = vunpack.c.h.b16 %v1282
    %v1705 = vunpack.c.l.b16 %v1283
    %v1706 = vunpack.c.h.b16 %v1283
    %v1707 = vunpack.c.l.b16 %v1284
    %v1708 = vunpack.c.h.b16 %v1284
    %v1709 = vunpack.c.l.b16 %v1285
    %v1710 = vunpack.c.h.b16 %v1285
    %v1711 = vunpack.c.l.b16 %v1286
    %v1712 = vunpack.c.h.b16 %v1286
    %v1713 = vunpack.c.l.b16 %v1287
    %v1714 = vunpack.c.h.b16 %v1287
    %v1715 = vunpack.c.l.b16 %v1288
    %v1716 = vunpack.c.h.b16 %v1288
    %v1717 = vunpack.c.l.b16 %v1289
    %v1718 = vunpack.c.h.b16 %v1289
    %v1719 = vunpack.c.l.b16 %v1290
    %v1720 = vunpack.c.h.b16 %v1290
    %v1721 = vunpack.c.l.b16 %v1291
    %v1722 = vunpack.c.h.b16 %v1291
    %v1723 = vunpack.c.l.b16 %v1292
    %v1724 = vunpack.c.h.b16 %v1292
    %v1725 = vunpack.c.l.b16 %v1293
    %v1726 = vunpack.c.h.b16 %v1293
    %v1727 = vunpack.c.l.b16 %v1294
    %v1728 = vunpack.c.h.b16 %v1294
    %v1729 = vunpack.c.l.b16 %v1295
    %v1730 = vunpack.c.h.b16 %v1295
    %v1731 = vunpack.c.l.b16 %v1296
    %v1732 = vunpack.c.h.b16 %v1296
    %v1733 = vunpack.c.l.b16 %v1297
    %v1734 = vunpack.c.h.b16 %v1297
    %v1735 = vunpack.c.l.b16 %v1298
    %v1736 = vunpack.c.h.b16 %v1298
    %v1737 = vunpack.c.l.b16 %v1299
    %v1738 = vunpack.c.h.b16 %v1299
    %v1739 = vunpack.c.l.b16 %v1300
    %v1740 = vunpack.c.h.b16 %v1300
    %v1741 = vunpack.c.l.b16 %v1301
    %v1742 = vunpack.c.h.b16 %v1301
    %v1743 = vunpack.c.l.b16 %v1302
    %v1744 = vunpack.c.h.b16 %v1302
    %v1745 = vunpack.c.l.b16 %v1303
    %v1746 = vunpack.c.h.b16 %v1303
    %v1747 = vunpack.c.l.b16 %v1304
    %v1748 = vunpack.c.h.b16 %v1304
    %v1749 = vunpack.c.l.b16 %v1305
    %v1750 = vunpack.c.h.b16 %v1305
    %v1751 = vunpack.c.l.b16 %v1306
    %v1752 = vunpack.c.h.b16 %v1306
    %v1753 = vunpack.c.l.b16 %v1307
    %v1754 = vunpack.c.h.b16 %v1307
    %v1755 = vunpack.c.l.b16 %v1308
    %v1756 = vunpack.c.h.b16 %v1308
    %v1757 = vunpack.c.l.b16 %v1309
    %v1758 = vunpack.c.h.b16 %v1309
    %v1759 = vunpack.c.l.b16 %v1310
    %v1760 = vunpack.c.h.b16 %v1310
    %v1761 = vunpack.c.l.b16 %v1311
    %v1762 = vunpack.c.h.b16 %v1311
    %v1763 = vunpack.c.l.b16 %v1312
    %v1764 = vunpack.c.h.b16 %v1312
    %v1765 = vunpack.c.l.b16 %v1313
    %v1766 = vunpack.c.h.b16 %v1313
    %v1767 = vunpack.c.l.b16 %v1314
    %v1768 = vunpack.c.h.b16 %v1314
    %v1769 = vunpack.c.l.b16 %v1315
    %v1770 = vunpack.c.h.b16 %v1315
    %v1771 = vunpack.c.l.b16 %v1316
    %v1772 = vunpack.c.h.b16 %v1316
    %v1773 = vunpack.c.l.b16 %v1317
    %v1774 = vunpack.c.h.b16 %v1317
    %v1775 = vunpack.c.l.b16 %v1318
    %v1776 = vunpack.c.h.b16 %v1318
    %v1777 = vunpack.c.l.b16 %v1319
    %v1778 = vunpack.c.h.b16 %v1319
    %v1779 = vunpack.c.l.b16 %v1320
    %v1780 = vunpack.c.h.b16 %v1320
    %v1781 = vunpack.c.l.b16 %v1321
    %v1782 = vunpack.c.h.b16 %v1321
    %v1783 = vunpack.c.l.b16 %v1322
    %v1784 = vunpack.c.h.b16 %v1322
    %v1785 = vunpack.c.l.b16 %v1323
    %v1786 = vunpack.c.h.b16 %v1323
    %v1787 = vunpack.c.l.b16 %v1324
    %v1788 = vunpack.c.h.b16 %v1324
    %v1789 = vunpack.c.l.b16 %v1325
    %v1790 = vunpack.c.h.b16 %v1325
    %v1791 = vunpack.c.l.b16 %v1326
    %v1792 = vunpack.c.h.b16 %v1326
    %v1793 = vunpack.c.l.b16 %v1327
    %v1794 = vunpack.c.h.b16 %v1327
    %v1795 = vunpack.c.l.b16 %v1328
    %v1796 = vunpack.c.h.b16 %v1328
    %v1797 = vunpack.c.l.b16 %v1329
    %v1798 = vunpack.c.h.b16 %v1329
    %v1799 = vunpack.c.l.b16 %v1330
    %v1800 = vunpack.c.h.b16 %v1330
    %v1801 = vunpack.c.l.b16 %v1331
    %v1802 = vunpack.c.h.b16 %v1331
    %v1803 = vunpack.c.l.b16 %v1332
    %v1804 = vunpack.c.h.b16 %v1332
    %v1805 = vunpack.c.l.b16 %v1333
    %v1806 = vunpack.c.h.b16 %v1333
    %v1807 = vunpack.c.l.b16 %v1334
    %v1808 = vunpack.c.h.b16 %v1334
    %v1809 = vunpack.c.l.b16 %v1335
    %v1810 = vunpack.c.h.b16 %v1335
    %v1811 = vunpack.c.l.b16 %v1336
    %v1812 = vunpack.c.h.b16 %v1336
    %v1813 = vunpack.c.l.b16 %v1337
    %v1814 = vunpack.c.h.b16 %v1337
    %v1815 = vunpack.c.l.b16 %v1338
    %v1816 = vunpack.c.h.b16 %v1338
    %v1817 = vunpack.c.l.b16 %v1339
    %v1818 = vunpack.c.h.b16 %v1339
    %v1819 = vunpack.c.l.b16 %v1340
    %v1820 = vunpack.c.h.b16 %v1340
    %v1821 = vunpack.c.l.b16 %v1341
    %v1822 = vunpack.c.h.b16 %v1341
    %v1823 = vunpack.c.l.b16 %v1342
    %v1824 = vunpack.c.h.b16 %v1342
    %v1825 = vunpack.c.l.b16 %v1343
    %v1826 = vunpack.c.h.b16 %v1343
    %v1827 = vunpack.c.l.b16 %v1344
    %v1828 = vunpack.c.h.b16 %v1344
    %v1829 = vunpack.c.l.b16 %v1345
    %v1830 = vunpack.c.h.b16 %v1345
    %v1831 = vunpack.c.l.b16 %v1346
    %v1832 = vunpack.c.h.b16 %v1346
    %v1833 = vunpack.c.l.b16 %v1347
    %v1834 = vunpack.c.h.b16 %v1347
    %v1835 = vunpack.c.l.b16 %v1348
    %v1836 = vunpack.c.h.b16 %v1348
    %v1837 = vunpack.c.l.b16 %v1349
    %v1838 = vunpack.c.h.b16 %v1349
    %v1839 = vunpack.c.l.b16 %v1350
    %v1840 = vunpack.c.h.b16 %v1350
    %v1841 = vunpack.c.l.b16 %v1351
    %v1842 = vunpack.c.h.b16 %v1351
    %v1843 = vunpack.c.l.b16 %v1352
    %v1844 = vunpack.c.h.b16 %v1352
    %v1845 = vunpack.c.l.b16 %v1353
    %v1846 = vunpack.c.h.b16 %v1353
    %v1847 = vunpack.c.l.b16 %v1354
    %v1848 = vunpack.c.h.b16 %v1354
    %v1849 = vunpack.c.l.b16 %v1355
    %v1850 = vunpack.c.h.b16 %v1355
    %v1851 = vunpack.c.l.b16 %v1356
    %v1852 = vunpack.c.h.b16 %v1356
    %v1853 = vunpack.c.l.b16 %v1357
    %v1854 = vunpack.c.h.b16 %v1357
    %v1855 = vunpack.c.l.b16 %v1358
    %v1856 = vunpack.c.h.b16 %v1358
    %v1857 = vunpack.c.l.b16 %v1359
    %v1858 = vunpack.c.h.b16 %v1359
    %v1859 = vunpack.c.l.b16 %v1360
    %v1860 = vunpack.c.h.b16 %v1360
    %v1861 = vunpack.c.l.b16 %v1361
    %v1862 = vunpack.c.h.b16 %v1361
    %v1863 = vunpack.c.l.b16 %v1362
    %v1864 = vunpack.c.h.b16 %v1362
    %v1865 = vunpack.c.l.b16 %v1363
    %v1866 = vunpack.c.h.b16 %v1363
    %v1867 = vunpack.c.l.b16 %v1364
    %v1868 = vunpack.c.h.b16 %v1364
    %v1869 = vunpack.c.l.b16 %v1365
    %v1870 = vunpack.c.h.b16 %v1365
    %v1871 = vunpack.c.l.b16 %v1366
    %v1872 = vunpack.c.h.b16 %v1366
    %v1873 = vunpack.c.l.b16 %v1367
    %v1874 = vunpack.c.h.b16 %v1367
    %v1875 = vunpack.c.l.b16 %v1368
    %v1876 = vunpack.c.h.b16 %v1368
    %v1877 = vunpack.c.l.b16 %v1369
    %v1878 = vunpack.c.h.b16 %v1369
    %v1879 = vunpack.c.l.b16 %v1370
    %v1880 = vunpack.c.h.b16 %v1370
    %v1881 = vunpack.c.l.b16 %v1371
    %v1882 = vunpack.c.h.b16 %v1371
    %v1883 = vunpack.c.l.b16 %v1372
    %v1884 = vunpack.c.h.b16 %v1372
    %v1885 = vunpack.c.l.b16 %v1373
    %v1886 = vunpack.c.h.b16 %v1373
    %v1887 = vunpack.c.l.b16 %v1374
    %v1888 = vunpack.c.h.b16 %v1374
    %v1889 = vunpack.c.l.b16 %v1375
    %v1890 = vunpack.c.h.b16 %v1375
    %v1891 = vunpack.c.l.b16 %v1376
    %v1892 = vunpack.c.h.b16 %v1376
    %v1893 = vunpack.c.l.b16 %v1377
    %v1894 = vunpack.c.h.b16 %v1377
    %v1895 = vunpack.c.l.b16 %v1378
    %v1896 = vunpack.c.h.b16 %v1378
    %v1897 = vunpack.c.l.b16 %v1379
    %v1898 = vunpack.c.h.b16 %v1379
    %v1899 = vunpack.c.l.b16 %v1380
    %v1900 = vunpack.c.h.b16 %v1380
    %v1901 = vunpack.c.l.b16 %v1381
    %v1902 = vunpack.c.h.b16 %v1381
    %v1903 = vunpack.c.l.b16 %v1382
    %v1904 = vunpack.c.h.b16 %v1382
    %v1905 = vunpack.c.l.b16 %v1383
    %v1906 = vunpack.c.h.b16 %v1383
    %v1907 = vunpack.c.l.b16 %v1384
    %v1908 = vunpack.c.h.b16 %v1384
    %v1909 = vunpack.c.l.b16 %v1385
    %v1910 = vunpack.c.h.b16 %v1385
    %v1911 = vunpack.c.l.b16 %v1386
    %v1912 = vunpack.c.h.b16 %v1386
    %v1913 = vunpack.c.l.b16 %v1387
    %v1914 = vunpack.c.h.b16 %v1387
    %v1915 = vunpack.c.l.b16 %v1388
    %v1916 = vunpack.c.h.b16 %v1388
    %v1917 = vunpack.c.l.b16 %v1389
    %v1918 = vunpack.c.h.b16 %v1389
    %v1919 = vunpack.c.l.b16 %v1390
    %v1920 = vunpack.c.h.b16 %v1390
    %v1921 = vpack.c.b16 %v1635, %v1633
    %v1922 = vpack.c.b16 %v1636, %v1634
    %v1923 = vpack.c.b16 %v1639, %v1637
    %v1924 = vpack.c.b16 %v1640, %v1638
    %v1925 = vpack.c.b16 %v1643, %v1641
    %v1926 = vpack.c.b16 %v1644, %v1642
    %v1927 = vpack.c.b16 %v1647, %v1645
    %v1928 = vpack.c.b16 %v1648, %v1646
    %v1929 = vpack.c.b16 %v1651, %v1649
    %v1930 = vpack.c.b16 %v1652, %v1650
    %v1931 = vpack.c.b16 %v1655, %v1653
    %v1932 = vpack.c.b16 %v1656, %v1654
    %v1933 = vpack.c.b16 %v1659, %v1657
    %v1934 = vpack.c.b16 %v1660, %v1658
    %v1935 = vpack.c.b16 %v1663, %v1661
    %v1936 = vpack.c.b16 %v1664, %v1662
    %v1937 = vpack.c.b16 %v1667, %v1665
    %v1938 = vpack.c.b16 %v1668, %v1666
    %v1939 = vpack.c.b16 %v1671, %v1669
    %v1940 = vpack.c.b16 %v1672, %v1670
    %v1941 = vpack.c.b16 %v1675, %v1673
    %v1942 = vpack.c.b16 %v1676, %v1674
    %v1943 = vpack.c.b16 %v1679, %v1677
    %v1944 = vpack.c.b16 %v1680, %v1678
    %v1945 = vpack.c.b16 %v1683, %v1681
    %v1946 = vpack.c.b16 %v1684, %v1682
    %v1947 = vpack.c.b16 %v1687, %v1685
    %v1948 = vpack.c.b16 %v1688, %v1686
    %v1949 = vpack.c.b16 %v1691, %v1689
    %v1950 = vpack.c.b16 %v1692, %v1690
    %v1951 = vpack.c.b16 %v1695, %v1693
    %v1952 = vpack.c.b16 %v1696, %v1694
    %v1953 = vpack.c.b16 %v1699, %v1697
    %v1954 = vpack.c.b16 %v1700, %v1698
    %v1955 = vpack.c.b16 %v1703, %v1701
    %v1956 = vpack.c.b16 %v1704, %v1702
    %v1957 = vpack.c.b16 %v1707, %v1705
    %v1958 = vpack.c.b16 %v1708, %v1706
    %v1959 = vpack.c.b16 %v1711, %v1709
    %v1960 = vpack.c.b16 %v1712, %v1710
    %v1961 = vpack.c.b16 %v1715, %v1713
    %v1962 = vpack.c.b16 %v1716, %v1714
    %v1963 = vpack.c.b16 %v1719, %v1717
    %v1964 = vpack.c.b16 %v1720, %v1718
    %v1965 = vpack.c.b16 %v1723, %v1721
    %v1966 = vpack.c.b16 %v1724, %v1722
    %v1967 = vpack.c.b16 %v1727, %v1725
    %v1968 = vpack.c.b16 %v1728, %v1726
    %v1969 = vpack.c.b16 %v1731, %v1729
    %v1970 = vpack.c.b16 %v1732, %v1730
    %v1971 = vpack.c.b16 %v1735, %v1733
    %v1972 = vpack.c.b16 %v1736, %v1734
    %v1973 = vpack.c.b16 %v1739, %v1737
    %v1974 = vpack.c.b16 %v1740, %v1738
    %v1975 = vpack.c.b16 %v1743, %v1741
    %v1976 = vpack.c.b16 %v1744, %v1742
    %v1977 = vpack.c.b16 %v1747, %v1745
    %v1978 = vpack.c.b16 %v1748, %v1746
    %v1979 = vpack.c.b16 %v1751, %v1749
    %v1980 = vpack.c.b16 %v1752, %v1750
    %v1981 = vpack.c.b16 %v1755, %v1753
    %v1982 = vpack.c.b16 %v1756, %v1754
    %v1983 = vpack.c.b16 %v1759, %v1757
    %v1984 = vpack.c.b16 %v1760, %v1758
    %v1985 = vpack.c.b16 %v1763, %v1761
    %v1986 = vpack.c.b16 %v1764, %v1762
    %v1987 = vpack.c.b16 %v1767, %v1765
    %v1988 = vpack.c.b16 %v1768, %v1766
    %v1989 = vpack.c.b16 %v1771, %v1769
    %v1990 = vpack.c.b16 %v1772, %v1770
    %v1991 = vpack.c.b16 %v1775, %v1773
    %v1992 = vpack.c.b16 %v1776, %v1774
    %v1993 = vpack.c.b16 %v1779, %v1777
    %v1994 = vpack.c.b16 %v1780, %v1778
    %v1995 = vpack.c.b16 %v1783, %v1781
    %v1996 = vpack.c.b16 %v1784, %v1782
    %v1997 = vpack.c.b16 %v1787, %v1785
    %v1998 = vpack.c.b16 %v1788, %v1786
    %v1999 = vpack.c.b16 %v1791, %v1789
    %v2000 = vpack.c.b16 %v1792, %v1790
    %v2001 = vpack.c.b16 %v1795, %v1793
    %v2002 = vpack.c.b16 %v1796, %v1794
    %v2003 = vpack.c.b16 %v1799, %v1797
    %v2004 = vpack.c.b16 %v1800, %v1798
    %v2005 = vpack.c.b16 %v1803, %v1801
    %v2006 = vpack.c.b16 %v1804, %v1802
    %v2007 = vpack.c.b16 %v1807, %v1805
    %v2008 = vpack.c.b16 %v1808, %v1806
    %v2009 = vpack.c.b16 %v1811, %v1809
    %v2010 = vpack.c.b16 %v1812, %v1810
    %v2011 = vpack.c.b16 %v1815, %v1813
    %v2012 = vpack.c.b16 %v1816, %v1814
    %v2013 = vpack.c.b16 %v1819, %v1817
    %v2014 = vpack.c.b16 %v1820, %v1818
    %v2015 = vpack.c.b16 %v1823, %v1821
    %v2016 = vpack.c.b16 %v1824, %v1822
    %v2017 = vpack.c.b16 %v1827, %v1825
    %v2018 = vpack.c.b16 %v1828, %v1826
    %v2019 = vpack.c.b16 %v1831, %v1829
    %v2020 = vpack.c.b16 %v1832, %v1830
    %v2021 = vpack.c.b16 %v1835, %v1833
    %v2022 = vpack.c.b16 %v1836, %v1834
    %v2023 = vpack.c.b16 %v1839, %v1837
    %v2024 = vpack.c.b16 %v1840, %v1838
    %v2025 = vpack.c.b16 %v1843, %v1841
    %v2026 = vpack.c.b16 %v1844, %v1842
    %v2027 = vpack.c.b16 %v1847, %v1845
    %v2028 = vpack.c.b16 %v1848, %v1846
    %v2029 = vpack.c.b16 %v1851, %v1849
    %v2030 = vpack.c.b16 %v1852, %v1850
    %v2031 = vpack.c.b16 %v1855, %v1853
    %v2032 = vpack.c.b16 %v1856, %v1854
    %v2033 = vpack.c.b16 %v1859, %v1857
    %v2034 = vpack.c.b16 %v1860, %v1858
    %v2035 = vpack.c.b16 %v1863, %v1861
    %v2036 = vpack.c.b16 %v1864, %v1862
    %v2037 = vpack.c.b16 %v1867, %v1865
    %v2038 = vpack.c.b16 %v1868, %v1866
    %v2039 = vpack.c.b16 %v1871, %v1869
    %v2040 = vpack.c.b16 %v1872, %v1870
    %v2041 = vpack.c.b16 %v1875, %v1873
    %v2042 = vpack.c.b16 %v1876, %v1874
    %v2043 = vpack.c.b16 %v1879, %v1877
    %v2044 = vpack.c.b16 %v1880, %v1878
    %v2045 = vpack.c.b16 %v1883, %v1881
    %v2046 = vpack.c.b16 %v1884, %v1882
    %v2047 = vpack.c.b16 %v1887, %v1885
    %v2048 = vpack.c.b16 %v1888, %v1886
    %v2049 = vpack.c.b16 %v1891, %v1889
    %v2050 = vpack.c.b16 %v1892, %v1890
    %v2051 = vpack.c.b16 %v1895, %v1893
    %v2052 = vpack.c.b16 %v1896, %v1894
    %v2053 = vpack.c.b16 %v1899, %v1897
    %v2054 = vpack.c.b16 %v1900, %v1898
    %v2055 = vpack.c.b16 %v1903, %v1901
    %v2056 = vpack.c.b16 %v1904, %v1902
    %v2057 = vpack.c.b16 %v1907, %v1905
    %v2058 = vpack.c.b16 %v1908, %v1906
    %v2059 = vpack.c.b16 %v1911, %v1909
    %v2060 = vpack.c.b16 %v1912, %v1910
    %v2061 = vpack.c.b16 %v1915, %v1913
    %v2062 = vpack.c.b16 %v1916, %v1914
    %v2063 = vpack.c.b16 %v1919, %v1917
    %v2064 = vpack.c.b16 %v1920, %v1918
    %2209 = vmatpush.bf16.msra.mxu0 %v1935
    %2210 = vmatpush.bf16.msra.mxu0 %v1933
    %2211 = vmatpush.bf16.msra.mxu0 %v1931
    %2212 = vmatpush.bf16.msra.mxu0 %v1929
    %2213 = vmatpush.bf16.msra.mxu0 %v1927
    %2214 = vmatpush.bf16.msra.mxu0 %v1925
    %2215 = vmatpush.bf16.msra.mxu0 %v1923
    %2216 = vmatpush.bf16.msra.mxu0 %v1921
    %2217 = vmatmul.bf16.gmra.mxu0 %v1453
    %v2218 = vpop.f32.mrf.mxu0
    %v2219 = vadd.f32 %v1393, %v2218
    %v2220 = vpop.f32.mrf.mxu0
    %v2221 = vadd.f32 %v1393, %v2220
    %2222 = vmatmul.bf16.gmra.mxu0 %v1462
    %v2223 = vpop.f32.mrf.mxu0
    %v2224 = vadd.f32 %v1393, %v2223
    %v2225 = vpop.f32.mrf.mxu0
    %v2226 = vadd.f32 %v1393, %v2225
    %2227 = vdwg.mxu0
    %2228 = vmatpush.bf16.msra.mxu0 %v1951
    %2229 = vmatpush.bf16.msra.mxu0 %v1949
    %2230 = vmatpush.bf16.msra.mxu0 %v1947
    %2231 = vmatpush.bf16.msra.mxu0 %v1945
    %2232 = vmatpush.bf16.msra.mxu0 %v1943
    %2233 = vmatpush.bf16.msra.mxu0 %v1941
    %2234 = vmatpush.bf16.msra.mxu0 %v1939
    %2235 = vmatpush.bf16.msra.mxu0 %v1937
    %2236 = vmatmul.bf16.gmra.mxu0 %v1454
    %v2237 = vpop.f32.mrf.mxu0
    %v2238 = vadd.f32 %v2219, %v2237
    %v2239 = vpop.f32.mrf.mxu0
    %v2240 = vadd.f32 %v2221, %v2239
    %2241 = vmatmul.bf16.gmra.mxu0 %v1463
    %v2242 = vpop.f32.mrf.mxu0
    %v2243 = vadd.f32 %v2224, %v2242
    %v2244 = vpop.f32.mrf.mxu0
    %v2245 = vadd.f32 %v2226, %v2244
    %2246 = vdwg.mxu0
    %2247 = vmatpush.bf16.msra.mxu0 %v1967
    %2248 = vmatpush.bf16.msra.mxu0 %v1965
    %2249 = vmatpush.bf16.msra.mxu0 %v1963
    %2250 = vmatpush.bf16.msra.mxu0 %v1961
    %2251 = vmatpush.bf16.msra.mxu0 %v1959
    %2252 = vmatpush.bf16.msra.mxu0 %v1957
    %2253 = vmatpush.bf16.msra.mxu0 %v1955
    %2254 = vmatpush.bf16.msra.mxu0 %v1953
    %2255 = vmatmul.bf16.gmra.mxu0 %v1455
    %v2256 = vpop.f32.mrf.mxu0
    %v2257 = vadd.f32 %v2238, %v2256
    %v2258 = vpop.f32.mrf.mxu0
    %v2259 = vadd.f32 %v2240, %v2258
    %2260 = vmatmul.bf16.gmra.mxu0 %v1464
    %v2261 = vpop.f32.mrf.mxu0
    %v2262 = vadd.f32 %v2243, %v2261
    %v2263 = vpop.f32.mrf.mxu0
    %v2264 = vadd.f32 %v2245, %v2263
    %2265 = vdwg.mxu0
    %2266 = vmatpush.bf16.msra.mxu0 %v1983
    %2267 = vmatpush.bf16.msra.mxu0 %v1981
    %2268 = vmatpush.bf16.msra.mxu0 %v1979
    %2269 = vmatpush.bf16.msra.mxu0 %v1977
    %2270 = vmatpush.bf16.msra.mxu0 %v1975
    %2271 = vmatpush.bf16.msra.mxu0 %v1973
    %2272 = vmatpush.bf16.msra.mxu0 %v1971
    %2273 = vmatpush.bf16.msra.mxu0 %v1969
    %2274 = vmatmul.bf16.gmra.mxu0 %v1456
    %v2275 = vpop.f32.mrf.mxu0
    %v2276 = vadd.f32 %v2257, %v2275
    %v2277 = vpop.f32.mrf.mxu0
    %v2278 = vadd.f32 %v2259, %v2277
    %2279 = vmatmul.bf16.gmra.mxu0 %v1465
    %v2280 = vpop.f32.mrf.mxu0
    %v2281 = vadd.f32 %v2262, %v2280
    %v2282 = vpop.f32.mrf.mxu0
    %v2283 = vadd.f32 %v2264, %v2282
    %2284 = vdwg.mxu0
    %2285 = vmatpush.bf16.msra.mxu0 %v1999
    %2286 = vmatpush.bf16.msra.mxu0 %v1997
    %2287 = vmatpush.bf16.msra.mxu0 %v1995
    %2288 = vmatpush.bf16.msra.mxu0 %v1993
    %2289 = vmatpush.bf16.msra.mxu0 %v1991
    %2290 = vmatpush.bf16.msra.mxu0 %v1989
    %2291 = vmatpush.bf16.msra.mxu0 %v1987
    %2292 = vmatpush.bf16.msra.mxu0 %v1985
    %2293 = vmatmul.bf16.gmra.mxu0 %v1457
    %v2294 = vpop.f32.mrf.mxu0
    %v2295 = vadd.f32 %v2276, %v2294
    %v2296 = vpop.f32.mrf.mxu0
    %v2297 = vadd.f32 %v2278, %v2296
    %2298 = vmatmul.bf16.gmra.mxu0 %v1466
    %v2299 = vpop.f32.mrf.mxu0
    %v2300 = vadd.f32 %v2281, %v2299
    %v2301 = vpop.f32.mrf.mxu0
    %v2302 = vadd.f32 %v2283, %v2301
    %2303 = vdwg.mxu0
    %2304 = vmatpush.bf16.msra.mxu0 %v2015
    %2305 = vmatpush.bf16.msra.mxu0 %v2013
    %2306 = vmatpush.bf16.msra.mxu0 %v2011
    %2307 = vmatpush.bf16.msra.mxu0 %v2009
    %2308 = vmatpush.bf16.msra.mxu0 %v2007
    %2309 = vmatpush.bf16.msra.mxu0 %v2005
    %2310 = vmatpush.bf16.msra.mxu0 %v2003
    %2311 = vmatpush.bf16.msra.mxu0 %v2001
    %2312 = vmatmul.bf16.gmra.mxu0 %v1458
    %v2313 = vpop.f32.mrf.mxu0
    %v2314 = vadd.f32 %v2295, %v2313
    %v2315 = vpop.f32.mrf.mxu0
    %v2316 = vadd.f32 %v2297, %v2315
    %2317 = vmatmul.bf16.gmra.mxu0 %v1467
    %v2318 = vpop.f32.mrf.mxu0
    %v2319 = vadd.f32 %v2300, %v2318
    %v2320 = vpop.f32.mrf.mxu0
    %v2321 = vadd.f32 %v2302, %v2320
    %2322 = vdwg.mxu0
    %2323 = vmatpush.bf16.msra.mxu0 %v2031
    %2324 = vmatpush.bf16.msra.mxu0 %v2029
    %2325 = vmatpush.bf16.msra.mxu0 %v2027
    %2326 = vmatpush.bf16.msra.mxu0 %v2025
    %2327 = vmatpush.bf16.msra.mxu0 %v2023
    %2328 = vmatpush.bf16.msra.mxu0 %v2021
    %2329 = vmatpush.bf16.msra.mxu0 %v2019
    %2330 = vmatpush.bf16.msra.mxu0 %v2017
    %2331 = vmatmul.bf16.gmra.mxu0 %v1459
    %v2332 = vpop.f32.mrf.mxu0
    %v2333 = vadd.f32 %v2314, %v2332
    %v2334 = vpop.f32.mrf.mxu0
    %v2335 = vadd.f32 %v2316, %v2334
    %2336 = vmatmul.bf16.gmra.mxu0 %v1468
    %v2337 = vpop.f32.mrf.mxu0
    %v2338 = vadd.f32 %v2319, %v2337
    %v2339 = vpop.f32.mrf.mxu0
    %v2340 = vadd.f32 %v2321, %v2339
    %2341 = vdwg.mxu0
    %2342 = vmatpush.bf16.msra.mxu0 %v2047
    %2343 = vmatpush.bf16.msra.mxu0 %v2045
    %2344 = vmatpush.bf16.msra.mxu0 %v2043
    %2345 = vmatpush.bf16.msra.mxu0 %v2041
    %2346 = vmatpush.bf16.msra.mxu0 %v2039
    %2347 = vmatpush.bf16.msra.mxu0 %v2037
    %2348 = vmatpush.bf16.msra.mxu0 %v2035
    %2349 = vmatpush.bf16.msra.mxu0 %v2033
    %2350 = vmatmul.bf16.gmra.mxu0 %v1460
    %v2351 = vpop.f32.mrf.mxu0
    %v2352 = vadd.f32 %v2333, %v2351
    %v2353 = vpop.f32.mrf.mxu0
    %v2354 = vadd.f32 %v2335, %v2353
    %2355 = vmatmul.bf16.gmra.mxu0 %v1469
    %v2356 = vpop.f32.mrf.mxu0
    %v2357 = vadd.f32 %v2338, %v2356
    %v2358 = vpop.f32.mrf.mxu0
    %v2359 = vadd.f32 %v2340, %v2358
    %2360 = vdwg.mxu0
    %2361 = vmatpush.bf16.msra.mxu0 %v2063
    %2362 = vmatpush.bf16.msra.mxu0 %v2061
    %2363 = vmatpush.bf16.msra.mxu0 %v2059
    %2364 = vmatpush.bf16.msra.mxu0 %v2057
    %2365 = vmatpush.bf16.msra.mxu0 %v2055
    %2366 = vmatpush.bf16.msra.mxu0 %v2053
    %2367 = vmatpush.bf16.msra.mxu0 %v2051
    %2368 = vmatpush.bf16.msra.mxu0 %v2049
    %2369 = vmatmul.bf16.gmra.mxu0 %v1461
    %v2370 = vpop.f32.mrf.mxu0
    %v2371 = vadd.f32 %v2352, %v2370
    %v2372 = vpop.f32.mrf.mxu0
    %v2373 = vadd.f32 %v2354, %v2372
    %2374 = vmatmul.bf16.gmra.mxu0 %v1470
    %v2375 = vpop.f32.mrf.mxu0
    %v2376 = vadd.f32 %v2357, %v2375
    %v2377 = vpop.f32.mrf.mxu0
    %v2378 = vadd.f32 %v2359, %v2377
    %2379 = vdwg.mxu0
    %2380 = vmatpush.bf16.msra.mxu0 %v1936
    %2381 = vmatpush.bf16.msra.mxu0 %v1934
    %2382 = vmatpush.bf16.msra.mxu0 %v1932
    %2383 = vmatpush.bf16.msra.mxu0 %v1930
    %2384 = vmatpush.bf16.msra.mxu0 %v1928
    %2385 = vmatpush.bf16.msra.mxu0 %v1926
    %2386 = vmatpush.bf16.msra.mxu0 %v1924
    %2387 = vmatpush.bf16.msra.mxu0 %v1922
    %2388 = vmatmul.bf16.gmra.mxu0 %v1453
    %v2389 = vpop.f32.mrf.mxu0
    %v2390 = vadd.f32 %v1394, %v2389
    %v2391 = vpop.f32.mrf.mxu0
    %v2392 = vadd.f32 %v1394, %v2391
    %2393 = vmatmul.bf16.gmra.mxu0 %v1462
    %v2394 = vpop.f32.mrf.mxu0
    %v2395 = vadd.f32 %v1394, %v2394
    %v2396 = vpop.f32.mrf.mxu0
    %v2397 = vadd.f32 %v1394, %v2396
    %2398 = vdwg.mxu0
    %2399 = vmatpush.bf16.msra.mxu0 %v1952
    %2400 = vmatpush.bf16.msra.mxu0 %v1950
    %2401 = vmatpush.bf16.msra.mxu0 %v1948
    %2402 = vmatpush.bf16.msra.mxu0 %v1946
    %2403 = vmatpush.bf16.msra.mxu0 %v1944
    %2404 = vmatpush.bf16.msra.mxu0 %v1942
    %2405 = vmatpush.bf16.msra.mxu0 %v1940
    %2406 = vmatpush.bf16.msra.mxu0 %v1938
    %2407 = vmatmul.bf16.gmra.mxu0 %v1454
    %v2408 = vpop.f32.mrf.mxu0
    %v2409 = vadd.f32 %v2390, %v2408
    %v2410 = vpop.f32.mrf.mxu0
    %v2411 = vadd.f32 %v2392, %v2410
    %2412 = vmatmul.bf16.gmra.mxu0 %v1463
    %v2413 = vpop.f32.mrf.mxu0
    %v2414 = vadd.f32 %v2395, %v2413
    %v2415 = vpop.f32.mrf.mxu0
    %v2416 = vadd.f32 %v2397, %v2415
    %2417 = vdwg.mxu0
    %2418 = vmatpush.bf16.msra.mxu0 %v1968
    %2419 = vmatpush.bf16.msra.mxu0 %v1966
    %2420 = vmatpush.bf16.msra.mxu0 %v1964
    %2421 = vmatpush.bf16.msra.mxu0 %v1962
    %2422 = vmatpush.bf16.msra.mxu0 %v1960
    %2423 = vmatpush.bf16.msra.mxu0 %v1958
    %2424 = vmatpush.bf16.msra.mxu0 %v1956
    %2425 = vmatpush.bf16.msra.mxu0 %v1954
    %2426 = vmatmul.bf16.gmra.mxu0 %v1455
    %v2427 = vpop.f32.mrf.mxu0
    %v2428 = vadd.f32 %v2409, %v2427
    %v2429 = vpop.f32.mrf.mxu0
    %v2430 = vadd.f32 %v2411, %v2429
    %2431 = vmatmul.bf16.gmra.mxu0 %v1464
    %v2432 = vpop.f32.mrf.mxu0
    %v2433 = vadd.f32 %v2414, %v2432
    %v2434 = vpop.f32.mrf.mxu0
    %v2435 = vadd.f32 %v2416, %v2434
    %2436 = vdwg.mxu0
    %2437 = vmatpush.bf16.msra.mxu0 %v1984
    %2438 = vmatpush.bf16.msra.mxu0 %v1982
    %2439 = vmatpush.bf16.msra.mxu0 %v1980
    %2440 = vmatpush.bf16.msra.mxu0 %v1978
    %2441 = vmatpush.bf16.msra.mxu0 %v1976
    %2442 = vmatpush.bf16.msra.mxu0 %v1974
    %2443 = vmatpush.bf16.msra.mxu0 %v1972
    %2444 = vmatpush.bf16.msra.mxu0 %v1970
    %2445 = vmatmul.bf16.gmra.mxu0 %v1456
    %v2446 = vpop.f32.mrf.mxu0
    %v2447 = vadd.f32 %v2428, %v2446
    %v2448 = vpop.f32.mrf.mxu0
    %v2449 = vadd.f32 %v2430, %v2448
    %2450 = vmatmul.bf16.gmra.mxu0 %v1465
    %v2451 = vpop.f32.mrf.mxu0
    %v2452 = vadd.f32 %v2433, %v2451
    %v2453 = vpop.f32.mrf.mxu0
    %v2454 = vadd.f32 %v2435, %v2453
    %2455 = vdwg.mxu0
    %2456 = vmatpush.bf16.msra.mxu0 %v2000
    %2457 = vmatpush.bf16.msra.mxu0 %v1998
    %2458 = vmatpush.bf16.msra.mxu0 %v1996
    %2459 = vmatpush.bf16.msra.mxu0 %v1994
    %2460 = vmatpush.bf16.msra.mxu0 %v1992
    %2461 = vmatpush.bf16.msra.mxu0 %v1990
    %2462 = vmatpush.bf16.msra.mxu0 %v1988
    %2463 = vmatpush.bf16.msra.mxu0 %v1986
    %2464 = vmatmul.bf16.gmra.mxu0 %v1457
    %v2465 = vpop.f32.mrf.mxu0
    %v2466 = vadd.f32 %v2447, %v2465
    %v2467 = vpop.f32.mrf.mxu0
    %v2468 = vadd.f32 %v2449, %v2467
    %2469 = vmatmul.bf16.gmra.mxu0 %v1466
    %v2470 = vpop.f32.mrf.mxu0
    %v2471 = vadd.f32 %v2452, %v2470
    %v2472 = vpop.f32.mrf.mxu0
    %v2473 = vadd.f32 %v2454, %v2472
    %2474 = vdwg.mxu0
    %2475 = vmatpush.bf16.msra.mxu0 %v2016
    %2476 = vmatpush.bf16.msra.mxu0 %v2014
    %2477 = vmatpush.bf16.msra.mxu0 %v2012
    %2478 = vmatpush.bf16.msra.mxu0 %v2010
    %2479 = vmatpush.bf16.msra.mxu0 %v2008
    %2480 = vmatpush.bf16.msra.mxu0 %v2006
    %2481 = vmatpush.bf16.msra.mxu0 %v2004
    %2482 = vmatpush.bf16.msra.mxu0 %v2002
    %2483 = vmatmul.bf16.gmra.mxu0 %v1458
    %v2484 = vpop.f32.mrf.mxu0
    %v2485 = vadd.f32 %v2466, %v2484
    %v2486 = vpop.f32.mrf.mxu0
    %v2487 = vadd.f32 %v2468, %v2486
    %2488 = vmatmul.bf16.gmra.mxu0 %v1467
    %v2489 = vpop.f32.mrf.mxu0
    %v2490 = vadd.f32 %v2471, %v2489
    %v2491 = vpop.f32.mrf.mxu0
    %v2492 = vadd.f32 %v2473, %v2491
    %2493 = vdwg.mxu0
    %2494 = vmatpush.bf16.msra.mxu0 %v2032
    %2495 = vmatpush.bf16.msra.mxu0 %v2030
    %2496 = vmatpush.bf16.msra.mxu0 %v2028
    %2497 = vmatpush.bf16.msra.mxu0 %v2026
    %2498 = vmatpush.bf16.msra.mxu0 %v2024
    %2499 = vmatpush.bf16.msra.mxu0 %v2022
    %2500 = vmatpush.bf16.msra.mxu0 %v2020
    %2501 = vmatpush.bf16.msra.mxu0 %v2018
    %2502 = vmatmul.bf16.gmra.mxu0 %v1459
    %v2503 = vpop.f32.mrf.mxu0
    %v2504 = vadd.f32 %v2485, %v2503
    %v2505 = vpop.f32.mrf.mxu0
    %v2506 = vadd.f32 %v2487, %v2505
    %2507 = vmatmul.bf16.gmra.mxu0 %v1468
    %v2508 = vpop.f32.mrf.mxu0
    %v2509 = vadd.f32 %v2490, %v2508
    %v2510 = vpop.f32.mrf.mxu0
    %v2511 = vadd.f32 %v2492, %v2510
    %2512 = vdwg.mxu0
    %2513 = vmatpush.bf16.msra.mxu0 %v2048
    %2514 = vmatpush.bf16.msra.mxu0 %v2046
    %2515 = vmatpush.bf16.msra.mxu0 %v2044
    %2516 = vmatpush.bf16.msra.mxu0 %v2042
    %2517 = vmatpush.bf16.msra.mxu0 %v2040
    %2518 = vmatpush.bf16.msra.mxu0 %v2038
    %2519 = vmatpush.bf16.msra.mxu0 %v2036
    %2520 = vmatpush.bf16.msra.mxu0 %v2034
    %2521 = vmatmul.bf16.gmra.mxu0 %v1460
    %v2522 = vpop.f32.mrf.mxu0
    %v2523 = vadd.f32 %v2504, %v2522
    %v2524 = vpop.f32.mrf.mxu0
    %v2525 = vadd.f32 %v2506, %v2524
    %2526 = vmatmul.bf16.gmra.mxu0 %v1469
    %v2527 = vpop.f32.mrf.mxu0
    %v2528 = vadd.f32 %v2509, %v2527
    %v2529 = vpop.f32.mrf.mxu0
    %v2530 = vadd.f32 %v2511, %v2529
    %2531 = vdwg.mxu0
    %2532 = vmatpush.bf16.msra.mxu0 %v2064
    %2533 = vmatpush.bf16.msra.mxu0 %v2062
    %2534 = vmatpush.bf16.msra.mxu0 %v2060
    %2535 = vmatpush.bf16.msra.mxu0 %v2058
    %2536 = vmatpush.bf16.msra.mxu0 %v2056
    %2537 = vmatpush.bf16.msra.mxu0 %v2054
    %2538 = vmatpush.bf16.msra.mxu0 %v2052
    %2539 = vmatpush.bf16.msra.mxu0 %v2050
    %2540 = vmatmul.bf16.gmra.mxu0 %v1461
    %v2541 = vpop.f32.mrf.mxu0
    %v2542 = vadd.f32 %v2523, %v2541
    %v2543 = vpop.f32.mrf.mxu0
    %v2544 = vadd.f32 %v2525, %v2543
    %2545 = vmatmul.bf16.gmra.mxu0 %v1470
    %v2546 = vpop.f32.mrf.mxu0
    %v2547 = vadd.f32 %v2528, %v2546
    %v2548 = vpop.f32.mrf.mxu0
    %v2549 = vadd.f32 %v2530, %v2548
    %2550 = vdwg.mxu0
    %v2551 = vmax.f32 %v2371, 0.0
    %v2552 = vmax.f32 %v2542, 0.0
    %v2553 = vmax.f32 %v2373, 0.0
    %v2554 = vmax.f32 %v2544, 0.0
    %v2555 = vmax.f32 %v2376, 0.0
    %v2556 = vmax.f32 %v2547, 0.0
    %v2557 = vmax.f32 %v2378, 0.0
    %v2558 = vmax.f32 %v2549, 0.0
    %v2559 = vpack.c.bf16 %v2552, %v2551
    %v2560 = vpack.c.bf16 %v2554, %v2553
    %v2561 = vpack.c.bf16 %v2556, %v2555
    %v2562 = vpack.c.bf16 %v2558, %v2557
    %2563 = vst [vmem:[%s5] sm:$0xff] %v2559
    %2564 = vst [vmem:[%s5 + $0x8] sm:$0xff] %v2560
    %s2565 = scalar_lea.vmem %s5, 16
    %2566 = vst [vmem:[%s2565] sm:$0xff] %v2561
    %2567 = vst [vmem:[%s2565 + $0x8] sm:$0xff] %v2562
    // Predicated region
    $region26: #{double_convolution.1} parent=1 // pred_check
      _
    $region27: #{double_convolution.1} parent=1 // pred_check_branch
      %2569 = sbr.rel (0) target = $region29
    $region28: #{double_convolution.1} parent=1 // pred_region
      _
    $region29: #{double_convolution.1} parent=1 // pred_fallthru
      _
    // Predicated region
    $region30: #{double_convolution.1} parent=1 // pred_check
      _
    $region31: #{double_convolution.1} parent=1 // pred_check_branch
      %2571 = sbr.rel (0) target = $region33
    $region32: #{double_convolution.1} parent=1 // pred_region
      _
    $region33: #{double_convolution.1} parent=1 // pred_fallthru
      _
    %2572 = vsyncpa [#allocation6], 1

</llo_original>
